<compile_context>
chip_gen: v7x
topology: tpu7x:2x2x1
jax: 0.10.0
libtpu: 0.0.40
codegen_flags: <defaults>
</compile_context>

<pallas_src>
import jax
import jax.numpy as jnp
from jax import lax
from jax.experimental import pallas as pl
from jax.experimental.pallas import tpu as pltpu
import numpy as np


def _attention_kernel(x_ref, bias_ref, wqkv_ref, wproj_ref, bproj_ref, o_ref):
    # x_ref    : (Bt, N, C)   bf16 — Bt batch elements per grid step
    # bias_ref : (Bt, 1, N)   f32 additive key-mask bias (0 or -inf)
    # wqkv_ref : (C, 3C)      bf16, Wqkv^T with softmax scale folded into Q cols
    # wproj_ref: (H, Dh, C)   bf16, Wproj^T reshaped head-major
    # bproj_ref: (1, C)       f32
    # o_ref    : (Bt, N, C)   f32
    bt, n, c = x_ref.shape
    num_heads, dh, _ = wproj_ref.shape
    m_rows = bt * n

    # Fused QKV projection: one (Bt*N, C) x (C, 3C) bf16 matmul, f32 accumulate.
    x2 = x_ref[...].reshape(m_rows, c)
    qkv = jnp.dot(x2, wqkv_ref[...], preferred_element_type=jnp.float32)

    # Split q/k/v with full-C lane slices (done once), cast back to bf16 so the
    # per-head matmuls feed the MXU bf16 operands.
    q = qkv[:, 0:c].astype(jnp.bfloat16).reshape(bt, n, c)       # pre-scaled
    k = qkv[:, c:2 * c].astype(jnp.bfloat16).reshape(bt, n, c)
    v = qkv[:, 2 * c:3 * c].astype(jnp.bfloat16).reshape(bt, n, c)

    # Hoist the mask broadcast out of the head loop (JAX does not CSE it).
    bias = jnp.broadcast_to(bias_ref[...], (bt, n, n))           # f32

    # Accumulate the output projection per head — no lane-axis concat, every
    # intermediate store stays lane-dense (full C wide). Start from the bias.
    acc = jnp.broadcast_to(bproj_ref[...], (m_rows, c))          # f32

    for h in range(num_heads):                                   # static unroll
        sl = slice(h * dh, (h + 1) * dh)
        qh = q[:, :, sl]                                         # (Bt, N, Dh)
        kh = k[:, :, sl]
        vh = v[:, :, sl]

        # Batched scores (Bt, N, N): bf16 operands, f32 MXU accumulation.
        s = jnp.einsum('bqd,bkd->bqk', qh, kh,
                       preferred_element_type=jnp.float32)
        s = s + bias                                             # key masking
        m = jnp.max(s, axis=-1, keepdims=True)
        e = jnp.exp(s - m)
        denom = jnp.sum(e, axis=-1, keepdims=True)
        p = (e * pl.reciprocal(denom, approx=True)).astype(jnp.bfloat16)

        oh = jnp.einsum('bqk,bkd->bqd', p, vh,
                        preferred_element_type=jnp.float32)      # (Bt, N, Dh)
        acc = acc + jnp.dot(oh.reshape(m_rows, dh).astype(jnp.bfloat16),
                            wproj_ref[h],
                            preferred_element_type=jnp.float32)

    o_ref[...] = acc.reshape(bt, n, c)


def _pick_batch_tile(batch, seq):
    """Largest divisor of `batch` keeping the per-step (Bt*N) row count and the
    per-head (Bt, N, N) score buffer bounded."""
    best = 1
    for cand in range(1, batch + 1):
        if batch % cand == 0 and cand * seq <= 512:
            best = cand
    return best


def attention_pallas(x, mask, w_qkv, w_proj, b_proj, num_heads):
    """x: (B, N, C) f32; mask: (B, N) (nonzero => masked key).

    w_qkv: (3C, C) PyTorch Linear weight (qkv_bias=False),
    w_proj: (C, C), b_proj: (C,).  Returns (B, N, C) f32.
    """
    B, N, C = x.shape
    H = num_heads
    Dh = C // H
    scale = float(Dh) ** -0.5

    bt = _pick_batch_tile(B, N)

    # bf16 MXU operands (f32 accumulation inside the kernel); halves HBM bytes.
    x_bf = x.astype(jnp.bfloat16)

    # Additive key-mask bias: 0 for visible keys, -inf for masked keys.
    # Matches PyTorch masked_fill_(-inf); a fully-masked row yields NaN in
    # both implementations (PyTorch behaviour preserved).
    bias = jnp.where(mask > 0, -jnp.inf, 0.0).astype(jnp.float32).reshape(B, 1, N)

    # PyTorch Linear computes x @ W^T; fold the 1/sqrt(Dh) softmax scale into
    # the Q output columns of Wqkv (mathematically identical to scaling q@k^T).
    scale_row = jnp.concatenate(
        [jnp.full((C,), scale, jnp.float32), jnp.ones((2 * C,), jnp.float32)])
    wqkv_t = (w_qkv.T.astype(jnp.float32) * scale_row[None, :]).astype(jnp.bfloat16)
    # Head-major projection weight: y = sum_h head_out_h @ wproj_hm[h].
    wproj_hm = w_proj.T.astype(jnp.float32).reshape(H, Dh, C).astype(jnp.bfloat16)
    bproj = b_proj.astype(jnp.float32).reshape(1, C)

    out = pl.pallas_call(
        _attention_kernel,
        out_shape=jax.ShapeDtypeStruct((B, N, C), jnp.float32),
        grid=(B // bt,),
        in_specs=[
            pl.BlockSpec((bt, N, C), lambda b: (b, 0, 0)),       # x (bf16)
            pl.BlockSpec((bt, 1, N), lambda b: (b, 0, 0)),       # mask bias
            pl.BlockSpec((C, 3 * C), lambda b: (0, 0)),          # Wqkv^T (bf16)
            pl.BlockSpec((H, Dh, C), lambda b: (0, 0, 0)),       # Wproj^T (bf16)
            pl.BlockSpec((1, C), lambda b: (0, 0)),              # bias proj
        ],
        out_specs=pl.BlockSpec((bt, N, C), lambda b: (b, 0, 0)),
        compiler_params=pltpu.CompilerParams(
            dimension_semantics=("parallel",)),
    )(x_bf, bias, wqkv_t, wproj_hm, bproj)
    return out


def attention_reference(x, mask, w_qkv, w_proj, b_proj, num_heads):
    """Pure-JAX reference matching the PyTorch Attention.forward (p_drop=0)."""
    B, N, C = x.shape
    H = num_heads
    Dh = C // H
    scale = float(Dh) ** -0.5
    hp = lax.Precision.HIGHEST

    qkv = jnp.einsum("bnc,fc->bnf", x, w_qkv, precision=hp)        # (B, N, 3C)
    qkv = qkv.reshape(B, N, 3, H, Dh).transpose(2, 0, 3, 1, 4)     # (3,B,H,N,Dh)
    q, k, v = qkv[0], qkv[1], qkv[2]

    attn = jnp.einsum("bhid,bhjd->bhij", q, k, precision=hp) * scale
    attn = jnp.where(mask[:, None, None, :] > 0, -jnp.inf, attn)
    attn = jax.nn.softmax(attn, axis=-1)

    out = jnp.einsum("bhij,bhjd->bhid", attn, v, precision=hp)     # (B,H,N,Dh)
    out = jnp.transpose(out, (0, 2, 1, 3)).reshape(B, N, C)
    return jnp.einsum("bnc,fc->bnf", out, w_proj, precision=hp) + b_proj[None, None, :]


if __name__ == "__main__":
    # Small shapes consistent with Attention(dim=32, num_heads=8): head_dim=4.
    B, N, C, H = 2, 8, 32, 8

    key = jax.random.PRNGKey(0)
    ks = jax.random.split(key, 6)

    x = jax.random.normal(ks[0], (B, N, C), jnp.float32)

    # Mask over key positions (nonzero => masked). Keep at least one key
    # unmasked per batch so no softmax row is fully -inf (matches PyTorch
    # behavior without NaNs).
    mask = (jax.random.uniform(ks[1], (B, N)) < 0.3).astype(jnp.float32)
    mask = mask.at[:, 0].set(0.0)

    # PyTorch Linear weights: qkv (3C, C) with no bias, proj (C, C) + bias.
    w_qkv = jax.random.normal(ks[2], (3 * C, C), jnp.float32) * 0.1
    w_proj = jax.random.normal(ks[3], (C, C), jnp.float32) * 0.1
    b_proj = jax.random.normal(ks[4], (C,), jnp.float32) * 0.1

    out = attention_pallas(x, mask, w_qkv, w_proj, b_proj, num_heads=H)
    out = jax.block_until_ready(out)

    ref = jax.block_until_ready(
        attention_reference(x, mask, w_qkv, w_proj, b_proj, num_heads=H))
    # Tolerance loosened vs. the all-f32 version: matmul operands are bf16
    # (f32 accumulation) per the performance review.
    np.testing.assert_allclose(np.asarray(out), np.asarray(ref),
                               rtol=2e-2, atol=2e-2)

    print("KERNEL_OK")
</pallas_src>

<mosaic_0001>
module attributes {stable_mosaic.version = 11 : i64} {
  func.func @_attention_kernel(%arg0: i32, %arg1: memref<2x8x32xbf16, #tpu.memory_space<vmem>>, %arg2: memref<2x1x8xf32, #tpu.memory_space<vmem>>, %arg3: memref<32x96xbf16, #tpu.memory_space<vmem>>, %arg4: memref<8x4x32xbf16, #tpu.memory_space<vmem>>, %arg5: memref<1x32xf32, #tpu.memory_space<vmem>>, %arg6: memref<2x8x32xf32, #tpu.memory_space<vmem>>) attributes {dimension_semantics = [#tpu.dimension_semantics<parallel>], iteration_bounds = array<i64: 1>, scalar_prefetch = 0 : i64, scratch_operands = 0 : i64, tpu.core_type = #tpu.core_type<tc>, window_params = [{transform_indices = @transform_0, window_bounds = array<i64: 2, 8, 32>}, {transform_indices = @transform_1, window_bounds = array<i64: 2, 1, 8>}, {pipeline_mode = #tpu.pipeline_mode<synchronous>, transform_indices = @transform_2, window_bounds = array<i64: 32, 96>}, {pipeline_mode = #tpu.pipeline_mode<synchronous>, transform_indices = @transform_3, window_bounds = array<i64: 8, 4, 32>}, {pipeline_mode = #tpu.pipeline_mode<synchronous>, transform_indices = @transform_4, window_bounds = array<i64: 1, 32>}, {transform_indices = @transform_5, window_bounds = array<i64: 2, 8, 32>}]} {
    %c0 = arith.constant 0 : index
    %c0_0 = arith.constant 0 : index
    %c0_1 = arith.constant 0 : index
    %0 = vector.load %arg1[%c0, %c0_0, %c0_1] : memref<2x8x32xbf16, #tpu.memory_space<vmem>>, vector<2x8x32xbf16>
    %1 = vector.shape_cast %0 : vector<2x8x32xbf16> to vector<16x32xbf16>
    %c0_2 = arith.constant 0 : index
    %c0_3 = arith.constant 0 : index
    %2 = vector.load %arg3[%c0_2, %c0_3] : memref<32x96xbf16, #tpu.memory_space<vmem>>, vector<32x96xbf16>
    %cst = arith.constant dense<0.000000e+00> : vector<16x96xf32>
    %3 = tpu.matmul %1, %2, %cst {dimension_numbers = #tpu.dot_dimension_numbers<[1], [0], [0], [1], [0, 0, 1, 1], [], []>} : vector<16x32xbf16>, vector<32x96xbf16>, vector<16x96xf32> -> vector<16x96xf32>
    %4 = vector.extract_strided_slice %3 {offsets = [0, 0], sizes = [16, 32], strides = [1, 1]} : vector<16x96xf32> to vector<16x32xf32>
    %5 = arith.truncf %4 : vector<16x32xf32> to vector<16x32xbf16>
    %6 = vector.shape_cast %5 : vector<16x32xbf16> to vector<2x8x32xbf16>
    %7 = vector.extract_strided_slice %3 {offsets = [0, 32], sizes = [16, 32], strides = [1, 1]} : vector<16x96xf32> to vector<16x32xf32>
    %8 = arith.truncf %7 : vector<16x32xf32> to vector<16x32xbf16>
    %9 = vector.shape_cast %8 : vector<16x32xbf16> to vector<2x8x32xbf16>
    %10 = vector.extract_strided_slice %3 {offsets = [0, 64], sizes = [16, 32], strides = [1, 1]} : vector<16x96xf32> to vector<16x32xf32>
    %11 = arith.truncf %10 : vector<16x32xf32> to vector<16x32xbf16>
    %12 = vector.shape_cast %11 : vector<16x32xbf16> to vector<2x8x32xbf16>
    %c0_4 = arith.constant 0 : index
    %c0_5 = arith.constant 0 : index
    %c0_6 = arith.constant 0 : index
    %13 = vector.load %arg2[%c0_4, %c0_5, %c0_6] : memref<2x1x8xf32, #tpu.memory_space<vmem>>, vector<2x1x8xf32>
    %14 = vector.shape_cast %13 : vector<2x1x8xf32> to vector<2x1x8xf32>
    %15 = vector.broadcast %14 : vector<2x1x8xf32> to vector<2x8x8xf32>
    %c0_7 = arith.constant 0 : index
    %c0_8 = arith.constant 0 : index
    %16 = vector.load %arg5[%c0_7, %c0_8] : memref<1x32xf32, #tpu.memory_space<vmem>>, vector<1x32xf32>
    %17 = vector.shape_cast %16 : vector<1x32xf32> to vector<1x32xf32>
    %18 = vector.broadcast %17 : vector<1x32xf32> to vector<16x32xf32>
    %19 = vector.extract_strided_slice %6 {offsets = [0, 0, 0], sizes = [2, 8, 4], strides = [1, 1, 1]} : vector<2x8x32xbf16> to vector<2x8x4xbf16>
    %20 = vector.extract_strided_slice %9 {offsets = [0, 0, 0], sizes = [2, 8, 4], strides = [1, 1, 1]} : vector<2x8x32xbf16> to vector<2x8x4xbf16>
    %21 = vector.extract_strided_slice %12 {offsets = [0, 0, 0], sizes = [2, 8, 4], strides = [1, 1, 1]} : vector<2x8x32xbf16> to vector<2x8x4xbf16>
    "tpu.trace_start"() <{level = 10 : i32, message = "bqd,bkd->bqk"}> : () -> ()
    %cst_9 = arith.constant dense<0.000000e+00> : vector<2x8x8xf32>
    %22 = tpu.matmul %19, %20, %cst_9 {dimension_numbers = #tpu.dot_dimension_numbers<[2], [2], [1], [1], [0, 0, 0, 1, 1, 1], [0], [0]>} : vector<2x8x4xbf16>, vector<2x8x4xbf16>, vector<2x8x8xf32> -> vector<2x8x8xf32>
    "tpu.trace_stop"() : () -> ()
    %23 = arith.addf %22, %15 : vector<2x8x8xf32>
    %cst_10 = arith.constant dense<0xFF800000> : vector<2x8xf32>
    %24 = vector.multi_reduction <maximumf>, %23, %cst_10 [2] : vector<2x8x8xf32> to vector<2x8xf32>
    %25 = vector.shape_cast %24 : vector<2x8xf32> to vector<2x8x1xf32>
    %26 = vector.broadcast %25 : vector<2x8x1xf32> to vector<2x8x8xf32>
    %27 = arith.subf %23, %26 : vector<2x8x8xf32>
    %28 = math.exp %27 : vector<2x8x8xf32>
    %cst_11 = arith.constant dense<0.000000e+00> : vector<2x8xf32>
    %29 = vector.multi_reduction <add>, %28, %cst_11 [2] : vector<2x8x8xf32> to vector<2x8xf32>
    %30 = vector.shape_cast %29 : vector<2x8xf32> to vector<2x8x1xf32>
    %31 = tpu.reciprocal %30 {approx = true} : vector<2x8x1xf32> -> vector<2x8x1xf32>
    %32 = vector.broadcast %31 : vector<2x8x1xf32> to vector<2x8x8xf32>
    %33 = arith.mulf %28, %32 : vector<2x8x8xf32>
    %34 = arith.truncf %33 : vector<2x8x8xf32> to vector<2x8x8xbf16>
    "tpu.trace_start"() <{level = 10 : i32, message = "bqk,bkd->bqd"}> : () -> ()
    %cst_12 = arith.constant dense<0.000000e+00> : vector<2x8x4xf32>
    %35 = tpu.matmul %34, %21, %cst_12 {dimension_numbers = #tpu.dot_dimension_numbers<[2], [1], [1], [2], [0, 0, 0, 1, 1, 2], [0], [0]>} : vector<2x8x8xbf16>, vector<2x8x4xbf16>, vector<2x8x4xf32> -> vector<2x8x4xf32>
    "tpu.trace_stop"() : () -> ()
    %36 = vector.shape_cast %35 : vector<2x8x4xf32> to vector<16x4xf32>
    %37 = arith.truncf %36 : vector<16x4xf32> to vector<16x4xbf16>
    %c0_13 = arith.constant 0 : index
    %c0_14 = arith.constant 0 : index
    %c0_15 = arith.constant 0 : index
    %38 = vector.load %arg4[%c0_13, %c0_14, %c0_15] : memref<8x4x32xbf16, #tpu.memory_space<vmem>>, vector<1x4x32xbf16>
    %39 = vector.shape_cast %38 : vector<1x4x32xbf16> to vector<4x32xbf16>
    %cst_16 = arith.constant dense<0.000000e+00> : vector<16x32xf32>
    %40 = tpu.matmul %37, %39, %cst_16 {dimension_numbers = #tpu.dot_dimension_numbers<[1], [0], [0], [1], [0, 0, 1, 1], [], []>} : vector<16x4xbf16>, vector<4x32xbf16>, vector<16x32xf32> -> vector<16x32xf32>
    %41 = arith.addf %18, %40 : vector<16x32xf32>
    %42 = vector.extract_strided_slice %6 {offsets = [0, 0, 4], sizes = [2, 8, 4], strides = [1, 1, 1]} : vector<2x8x32xbf16> to vector<2x8x4xbf16>
    %43 = vector.extract_strided_slice %9 {offsets = [0, 0, 4], sizes = [2, 8, 4], strides = [1, 1, 1]} : vector<2x8x32xbf16> to vector<2x8x4xbf16>
    %44 = vector.extract_strided_slice %12 {offsets = [0, 0, 4], sizes = [2, 8, 4], strides = [1, 1, 1]} : vector<2x8x32xbf16> to vector<2x8x4xbf16>
    "tpu.trace_start"() <{level = 10 : i32, message = "bqd,bkd->bqk"}> : () -> ()
    %cst_17 = arith.constant dense<0.000000e+00> : vector<2x8x8xf32>
    %45 = tpu.matmul %42, %43, %cst_17 {dimension_numbers = #tpu.dot_dimension_numbers<[2], [2], [1], [1], [0, 0, 0, 1, 1, 1], [0], [0]>} : vector<2x8x4xbf16>, vector<2x8x4xbf16>, vector<2x8x8xf32> -> vector<2x8x8xf32>
    "tpu.trace_stop"() : () -> ()
    %46 = arith.addf %45, %15 : vector<2x8x8xf32>
    %cst_18 = arith.constant dense<0xFF800000> : vector<2x8xf32>
    %47 = vector.multi_reduction <maximumf>, %46, %cst_18 [2] : vector<2x8x8xf32> to vector<2x8xf32>
    %48 = vector.shape_cast %47 : vector<2x8xf32> to vector<2x8x1xf32>
    %49 = vector.broadcast %48 : vector<2x8x1xf32> to vector<2x8x8xf32>
    %50 = arith.subf %46, %49 : vector<2x8x8xf32>
    %51 = math.exp %50 : vector<2x8x8xf32>
    %cst_19 = arith.constant dense<0.000000e+00> : vector<2x8xf32>
    %52 = vector.multi_reduction <add>, %51, %cst_19 [2] : vector<2x8x8xf32> to vector<2x8xf32>
    %53 = vector.shape_cast %52 : vector<2x8xf32> to vector<2x8x1xf32>
    %54 = tpu.reciprocal %53 {approx = true} : vector<2x8x1xf32> -> vector<2x8x1xf32>
    %55 = vector.broadcast %54 : vector<2x8x1xf32> to vector<2x8x8xf32>
    %56 = arith.mulf %51, %55 : vector<2x8x8xf32>
    %57 = arith.truncf %56 : vector<2x8x8xf32> to vector<2x8x8xbf16>
    "tpu.trace_start"() <{level = 10 : i32, message = "bqk,bkd->bqd"}> : () -> ()
    %cst_20 = arith.constant dense<0.000000e+00> : vector<2x8x4xf32>
    %58 = tpu.matmul %57, %44, %cst_20 {dimension_numbers = #tpu.dot_dimension_numbers<[2], [1], [1], [2], [0, 0, 0, 1, 1, 2], [0], [0]>} : vector<2x8x8xbf16>, vector<2x8x4xbf16>, vector<2x8x4xf32> -> vector<2x8x4xf32>
    "tpu.trace_stop"() : () -> ()
    %59 = vector.shape_cast %58 : vector<2x8x4xf32> to vector<16x4xf32>
    %60 = arith.truncf %59 : vector<16x4xf32> to vector<16x4xbf16>
    %c1 = arith.constant 1 : index
    %c0_21 = arith.constant 0 : index
    %c0_22 = arith.constant 0 : index
    %61 = vector.load %arg4[%c1, %c0_21, %c0_22] : memref<8x4x32xbf16, #tpu.memory_space<vmem>>, vector<1x4x32xbf16>
    %62 = vector.shape_cast %61 : vector<1x4x32xbf16> to vector<4x32xbf16>
    %cst_23 = arith.constant dense<0.000000e+00> : vector<16x32xf32>
    %63 = tpu.matmul %60, %62, %cst_23 {dimension_numbers = #tpu.dot_dimension_numbers<[1], [0], [0], [1], [0, 0, 1, 1], [], []>} : vector<16x4xbf16>, vector<4x32xbf16>, vector<16x32xf32> -> vector<16x32xf32>
    %64 = arith.addf %41, %63 : vector<16x32xf32>
    %65 = vector.extract_strided_slice %6 {offsets = [0, 0, 8], sizes = [2, 8, 4], strides = [1, 1, 1]} : vector<2x8x32xbf16> to vector<2x8x4xbf16>
    %66 = vector.extract_strided_slice %9 {offsets = [0, 0, 8], sizes = [2, 8, 4], strides = [1, 1, 1]} : vector<2x8x32xbf16> to vector<2x8x4xbf16>
    %67 = vector.extract_strided_slice %12 {offsets = [0, 0, 8], sizes = [2, 8, 4], strides = [1, 1, 1]} : vector<2x8x32xbf16> to vector<2x8x4xbf16>
    "tpu.trace_start"() <{level = 10 : i32, message = "bqd,bkd->bqk"}> : () -> ()
    %cst_24 = arith.constant dense<0.000000e+00> : vector<2x8x8xf32>
    %68 = tpu.matmul %65, %66, %cst_24 {dimension_numbers = #tpu.dot_dimension_numbers<[2], [2], [1], [1], [0, 0, 0, 1, 1, 1], [0], [0]>} : vector<2x8x4xbf16>, vector<2x8x4xbf16>, vector<2x8x8xf32> -> vector<2x8x8xf32>
    "tpu.trace_stop"() : () -> ()
    %69 = arith.addf %68, %15 : vector<2x8x8xf32>
    %cst_25 = arith.constant dense<0xFF800000> : vector<2x8xf32>
    %70 = vector.multi_reduction <maximumf>, %69, %cst_25 [2] : vector<2x8x8xf32> to vector<2x8xf32>
    %71 = vector.shape_cast %70 : vector<2x8xf32> to vector<2x8x1xf32>
    %72 = vector.broadcast %71 : vector<2x8x1xf32> to vector<2x8x8xf32>
    %73 = arith.subf %69, %72 : vector<2x8x8xf32>
    %74 = math.exp %73 : vector<2x8x8xf32>
    %cst_26 = arith.constant dense<0.000000e+00> : vector<2x8xf32>
    %75 = vector.multi_reduction <add>, %74, %cst_26 [2] : vector<2x8x8xf32> to vector<2x8xf32>
    %76 = vector.shape_cast %75 : vector<2x8xf32> to vector<2x8x1xf32>
    %77 = tpu.reciprocal %76 {approx = true} : vector<2x8x1xf32> -> vector<2x8x1xf32>
    %78 = vector.broadcast %77 : vector<2x8x1xf32> to vector<2x8x8xf32>
    %79 = arith.mulf %74, %78 : vector<2x8x8xf32>
    %80 = arith.truncf %79 : vector<2x8x8xf32> to vector<2x8x8xbf16>
    "tpu.trace_start"() <{level = 10 : i32, message = "bqk,bkd->bqd"}> : () -> ()
    %cst_27 = arith.constant dense<0.000000e+00> : vector<2x8x4xf32>
    %81 = tpu.matmul %80, %67, %cst_27 {dimension_numbers = #tpu.dot_dimension_numbers<[2], [1], [1], [2], [0, 0, 0, 1, 1, 2], [0], [0]>} : vector<2x8x8xbf16>, vector<2x8x4xbf16>, vector<2x8x4xf32> -> vector<2x8x4xf32>
    "tpu.trace_stop"() : () -> ()
    %82 = vector.shape_cast %81 : vector<2x8x4xf32> to vector<16x4xf32>
    %83 = arith.truncf %82 : vector<16x4xf32> to vector<16x4xbf16>
    %c2 = arith.constant 2 : index
    %c0_28 = arith.constant 0 : index
    %c0_29 = arith.constant 0 : index
    %84 = vector.load %arg4[%c2, %c0_28, %c0_29] : memref<8x4x32xbf16, #tpu.memory_space<vmem>>, vector<1x4x32xbf16>
    %85 = vector.shape_cast %84 : vector<1x4x32xbf16> to vector<4x32xbf16>
    %cst_30 = arith.constant dense<0.000000e+00> : vector<16x32xf32>
    %86 = tpu.matmul %83, %85, %cst_30 {dimension_numbers = #tpu.dot_dimension_numbers<[1], [0], [0], [1], [0, 0, 1, 1], [], []>} : vector<16x4xbf16>, vector<4x32xbf16>, vector<16x32xf32> -> vector<16x32xf32>
    %87 = arith.addf %64, %86 : vector<16x32xf32>
    %88 = vector.extract_strided_slice %6 {offsets = [0, 0, 12], sizes = [2, 8, 4], strides = [1, 1, 1]} : vector<2x8x32xbf16> to vector<2x8x4xbf16>
    %89 = vector.extract_strided_slice %9 {offsets = [0, 0, 12], sizes = [2, 8, 4], strides = [1, 1, 1]} : vector<2x8x32xbf16> to vector<2x8x4xbf16>
    %90 = vector.extract_strided_slice %12 {offsets = [0, 0, 12], sizes = [2, 8, 4], strides = [1, 1, 1]} : vector<2x8x32xbf16> to vector<2x8x4xbf16>
    "tpu.trace_start"() <{level = 10 : i32, message = "bqd,bkd->bqk"}> : () -> ()
    %cst_31 = arith.constant dense<0.000000e+00> : vector<2x8x8xf32>
    %91 = tpu.matmul %88, %89, %cst_31 {dimension_numbers = #tpu.dot_dimension_numbers<[2], [2], [1], [1], [0, 0, 0, 1, 1, 1], [0], [0]>} : vector<2x8x4xbf16>, vector<2x8x4xbf16>, vector<2x8x8xf32> -> vector<2x8x8xf32>
    "tpu.trace_stop"() : () -> ()
    %92 = arith.addf %91, %15 : vector<2x8x8xf32>
    %cst_32 = arith.constant dense<0xFF800000> : vector<2x8xf32>
    %93 = vector.multi_reduction <maximumf>, %92, %cst_32 [2] : vector<2x8x8xf32> to vector<2x8xf32>
    %94 = vector.shape_cast %93 : vector<2x8xf32> to vector<2x8x1xf32>
    %95 = vector.broadcast %94 : vector<2x8x1xf32> to vector<2x8x8xf32>
    %96 = arith.subf %92, %95 : vector<2x8x8xf32>
    %97 = math.exp %96 : vector<2x8x8xf32>
    %cst_33 = arith.constant dense<0.000000e+00> : vector<2x8xf32>
    %98 = vector.multi_reduction <add>, %97, %cst_33 [2] : vector<2x8x8xf32> to vector<2x8xf32>
    %99 = vector.shape_cast %98 : vector<2x8xf32> to vector<2x8x1xf32>
    %100 = tpu.reciprocal %99 {approx = true} : vector<2x8x1xf32> -> vector<2x8x1xf32>
    %101 = vector.broadcast %100 : vector<2x8x1xf32> to vector<2x8x8xf32>
    %102 = arith.mulf %97, %101 : vector<2x8x8xf32>
    %103 = arith.truncf %102 : vector<2x8x8xf32> to vector<2x8x8xbf16>
    "tpu.trace_start"() <{level = 10 : i32, message = "bqk,bkd->bqd"}> : () -> ()
    %cst_34 = arith.constant dense<0.000000e+00> : vector<2x8x4xf32>
    %104 = tpu.matmul %103, %90, %cst_34 {dimension_numbers = #tpu.dot_dimension_numbers<[2], [1], [1], [2], [0, 0, 0, 1, 1, 2], [0], [0]>} : vector<2x8x8xbf16>, vector<2x8x4xbf16>, vector<2x8x4xf32> -> vector<2x8x4xf32>
    "tpu.trace_stop"() : () -> ()
    %105 = vector.shape_cast %104 : vector<2x8x4xf32> to vector<16x4xf32>
    %106 = arith.truncf %105 : vector<16x4xf32> to vector<16x4xbf16>
    %c3 = arith.constant 3 : index
    %c0_35 = arith.constant 0 : index
    %c0_36 = arith.constant 0 : index
    %107 = vector.load %arg4[%c3, %c0_35, %c0_36] : memref<8x4x32xbf16, #tpu.memory_space<vmem>>, vector<1x4x32xbf16>
    %108 = vector.shape_cast %107 : vector<1x4x32xbf16> to vector<4x32xbf16>
    %cst_37 = arith.constant dense<0.000000e+00> : vector<16x32xf32>
    %109 = tpu.matmul %106, %108, %cst_37 {dimension_numbers = #tpu.dot_dimension_numbers<[1], [0], [0], [1], [0, 0, 1, 1], [], []>} : vector<16x4xbf16>, vector<4x32xbf16>, vector<16x32xf32> -> vector<16x32xf32>
    %110 = arith.addf %87, %109 : vector<16x32xf32>
    %111 = vector.extract_strided_slice %6 {offsets = [0, 0, 16], sizes = [2, 8, 4], strides = [1, 1, 1]} : vector<2x8x32xbf16> to vector<2x8x4xbf16>
    %112 = vector.extract_strided_slice %9 {offsets = [0, 0, 16], sizes = [2, 8, 4], strides = [1, 1, 1]} : vector<2x8x32xbf16> to vector<2x8x4xbf16>
    %113 = vector.extract_strided_slice %12 {offsets = [0, 0, 16], sizes = [2, 8, 4], strides = [1, 1, 1]} : vector<2x8x32xbf16> to vector<2x8x4xbf16>
    "tpu.trace_start"() <{level = 10 : i32, message = "bqd,bkd->bqk"}> : () -> ()
    %cst_38 = arith.constant dense<0.000000e+00> : vector<2x8x8xf32>
    %114 = tpu.matmul %111, %112, %cst_38 {dimension_numbers = #tpu.dot_dimension_numbers<[2], [2], [1], [1], [0, 0, 0, 1, 1, 1], [0], [0]>} : vector<2x8x4xbf16>, vector<2x8x4xbf16>, vector<2x8x8xf32> -> vector<2x8x8xf32>
    "tpu.trace_stop"() : () -> ()
    %115 = arith.addf %114, %15 : vector<2x8x8xf32>
    %cst_39 = arith.constant dense<0xFF800000> : vector<2x8xf32>
    %116 = vector.multi_reduction <maximumf>, %115, %cst_39 [2] : vector<2x8x8xf32> to vector<2x8xf32>
    %117 = vector.shape_cast %116 : vector<2x8xf32> to vector<2x8x1xf32>
    %118 = vector.broadcast %117 : vector<2x8x1xf32> to vector<2x8x8xf32>
    %119 = arith.subf %115, %118 : vector<2x8x8xf32>
    %120 = math.exp %119 : vector<2x8x8xf32>
    %cst_40 = arith.constant dense<0.000000e+00> : vector<2x8xf32>
    %121 = vector.multi_reduction <add>, %120, %cst_40 [2] : vector<2x8x8xf32> to vector<2x8xf32>
    %122 = vector.shape_cast %121 : vector<2x8xf32> to vector<2x8x1xf32>
    %123 = tpu.reciprocal %122 {approx = true} : vector<2x8x1xf32> -> vector<2x8x1xf32>
    %124 = vector.broadcast %123 : vector<2x8x1xf32> to vector<2x8x8xf32>
    %125 = arith.mulf %120, %124 : vector<2x8x8xf32>
    %126 = arith.truncf %125 : vector<2x8x8xf32> to vector<2x8x8xbf16>
    "tpu.trace_start"() <{level = 10 : i32, message = "bqk,bkd->bqd"}> : () -> ()
    %cst_41 = arith.constant dense<0.000000e+00> : vector<2x8x4xf32>
    %127 = tpu.matmul %126, %113, %cst_41 {dimension_numbers = #tpu.dot_dimension_numbers<[2], [1], [1], [2], [0, 0, 0, 1, 1, 2], [0], [0]>} : vector<2x8x8xbf16>, vector<2x8x4xbf16>, vector<2x8x4xf32> -> vector<2x8x4xf32>
    "tpu.trace_stop"() : () -> ()
    %128 = vector.shape_cast %127 : vector<2x8x4xf32> to vector<16x4xf32>
    %129 = arith.truncf %128 : vector<16x4xf32> to vector<16x4xbf16>
    %c4 = arith.constant 4 : index
    %c0_42 = arith.constant 0 : index
    %c0_43 = arith.constant 0 : index
    %130 = vector.load %arg4[%c4, %c0_42, %c0_43] : memref<8x4x32xbf16, #tpu.memory_space<vmem>>, vector<1x4x32xbf16>
    %131 = vector.shape_cast %130 : vector<1x4x32xbf16> to vector<4x32xbf16>
    %cst_44 = arith.constant dense<0.000000e+00> : vector<16x32xf32>
    %132 = tpu.matmul %129, %131, %cst_44 {dimension_numbers = #tpu.dot_dimension_numbers<[1], [0], [0], [1], [0, 0, 1, 1], [], []>} : vector<16x4xbf16>, vector<4x32xbf16>, vector<16x32xf32> -> vector<16x32xf32>
    %133 = arith.addf %110, %132 : vector<16x32xf32>
    %134 = vector.extract_strided_slice %6 {offsets = [0, 0, 20], sizes = [2, 8, 4], strides = [1, 1, 1]} : vector<2x8x32xbf16> to vector<2x8x4xbf16>
    %135 = vector.extract_strided_slice %9 {offsets = [0, 0, 20], sizes = [2, 8, 4], strides = [1, 1, 1]} : vector<2x8x32xbf16> to vector<2x8x4xbf16>
    %136 = vector.extract_strided_slice %12 {offsets = [0, 0, 20], sizes = [2, 8, 4], strides = [1, 1, 1]} : vector<2x8x32xbf16> to vector<2x8x4xbf16>
    "tpu.trace_start"() <{level = 10 : i32, message = "bqd,bkd->bqk"}> : () -> ()
    %cst_45 = arith.constant dense<0.000000e+00> : vector<2x8x8xf32>
    %137 = tpu.matmul %134, %135, %cst_45 {dimension_numbers = #tpu.dot_dimension_numbers<[2], [2], [1], [1], [0, 0, 0, 1, 1, 1], [0], [0]>} : vector<2x8x4xbf16>, vector<2x8x4xbf16>, vector<2x8x8xf32> -> vector<2x8x8xf32>
    "tpu.trace_stop"() : () -> ()
    %138 = arith.addf %137, %15 : vector<2x8x8xf32>
    %cst_46 = arith.constant dense<0xFF800000> : vector<2x8xf32>
    %139 = vector.multi_reduction <maximumf>, %138, %cst_46 [2] : vector<2x8x8xf32> to vector<2x8xf32>
    %140 = vector.shape_cast %139 : vector<2x8xf32> to vector<2x8x1xf32>
    %141 = vector.broadcast %140 : vector<2x8x1xf32> to vector<2x8x8xf32>
    %142 = arith.subf %138, %141 : vector<2x8x8xf32>
    %143 = math.exp %142 : vector<2x8x8xf32>
    %cst_47 = arith.constant dense<0.000000e+00> : vector<2x8xf32>
    %144 = vector.multi_reduction <add>, %143, %cst_47 [2] : vector<2x8x8xf32> to vector<2x8xf32>
    %145 = vector.shape_cast %144 : vector<2x8xf32> to vector<2x8x1xf32>
    %146 = tpu.reciprocal %145 {approx = true} : vector<2x8x1xf32> -> vector<2x8x1xf32>
    %147 = vector.broadcast %146 : vector<2x8x1xf32> to vector<2x8x8xf32>
    %148 = arith.mulf %143, %147 : vector<2x8x8xf32>
    %149 = arith.truncf %148 : vector<2x8x8xf32> to vector<2x8x8xbf16>
    "tpu.trace_start"() <{level = 10 : i32, message = "bqk,bkd->bqd"}> : () -> ()
    %cst_48 = arith.constant dense<0.000000e+00> : vector<2x8x4xf32>
    %150 = tpu.matmul %149, %136, %cst_48 {dimension_numbers = #tpu.dot_dimension_numbers<[2], [1], [1], [2], [0, 0, 0, 1, 1, 2], [0], [0]>} : vector<2x8x8xbf16>, vector<2x8x4xbf16>, vector<2x8x4xf32> -> vector<2x8x4xf32>
    "tpu.trace_stop"() : () -> ()
    %151 = vector.shape_cast %150 : vector<2x8x4xf32> to vector<16x4xf32>
    %152 = arith.truncf %151 : vector<16x4xf32> to vector<16x4xbf16>
    %c5 = arith.constant 5 : index
    %c0_49 = arith.constant 0 : index
    %c0_50 = arith.constant 0 : index
    %153 = vector.load %arg4[%c5, %c0_49, %c0_50] : memref<8x4x32xbf16, #tpu.memory_space<vmem>>, vector<1x4x32xbf16>
    %154 = vector.shape_cast %153 : vector<1x4x32xbf16> to vector<4x32xbf16>
    %cst_51 = arith.constant dense<0.000000e+00> : vector<16x32xf32>
    %155 = tpu.matmul %152, %154, %cst_51 {dimension_numbers = #tpu.dot_dimension_numbers<[1], [0], [0], [1], [0, 0, 1, 1], [], []>} : vector<16x4xbf16>, vector<4x32xbf16>, vector<16x32xf32> -> vector<16x32xf32>
    %156 = arith.addf %133, %155 : vector<16x32xf32>
    %157 = vector.extract_strided_slice %6 {offsets = [0, 0, 24], sizes = [2, 8, 4], strides = [1, 1, 1]} : vector<2x8x32xbf16> to vector<2x8x4xbf16>
    %158 = vector.extract_strided_slice %9 {offsets = [0, 0, 24], sizes = [2, 8, 4], strides = [1, 1, 1]} : vector<2x8x32xbf16> to vector<2x8x4xbf16>
    %159 = vector.extract_strided_slice %12 {offsets = [0, 0, 24], sizes = [2, 8, 4], strides = [1, 1, 1]} : vector<2x8x32xbf16> to vector<2x8x4xbf16>
    "tpu.trace_start"() <{level = 10 : i32, message = "bqd,bkd->bqk"}> : () -> ()
    %cst_52 = arith.constant dense<0.000000e+00> : vector<2x8x8xf32>
    %160 = tpu.matmul %157, %158, %cst_52 {dimension_numbers = #tpu.dot_dimension_numbers<[2], [2], [1], [1], [0, 0, 0, 1, 1, 1], [0], [0]>} : vector<2x8x4xbf16>, vector<2x8x4xbf16>, vector<2x8x8xf32> -> vector<2x8x8xf32>
    "tpu.trace_stop"() : () -> ()
    %161 = arith.addf %160, %15 : vector<2x8x8xf32>
    %cst_53 = arith.constant dense<0xFF800000> : vector<2x8xf32>
    %162 = vector.multi_reduction <maximumf>, %161, %cst_53 [2] : vector<2x8x8xf32> to vector<2x8xf32>
    %163 = vector.shape_cast %162 : vector<2x8xf32> to vector<2x8x1xf32>
    %164 = vector.broadcast %163 : vector<2x8x1xf32> to vector<2x8x8xf32>
    %165 = arith.subf %161, %164 : vector<2x8x8xf32>
    %166 = math.exp %165 : vector<2x8x8xf32>
    %cst_54 = arith.constant dense<0.000000e+00> : vector<2x8xf32>
    %167 = vector.multi_reduction <add>, %166, %cst_54 [2] : vector<2x8x8xf32> to vector<2x8xf32>
    %168 = vector.shape_cast %167 : vector<2x8xf32> to vector<2x8x1xf32>
    %169 = tpu.reciprocal %168 {approx = true} : vector<2x8x1xf32> -> vector<2x8x1xf32>
    %170 = vector.broadcast %169 : vector<2x8x1xf32> to vector<2x8x8xf32>
    %171 = arith.mulf %166, %170 : vector<2x8x8xf32>
    %172 = arith.truncf %171 : vector<2x8x8xf32> to vector<2x8x8xbf16>
    "tpu.trace_start"() <{level = 10 : i32, message = "bqk,bkd->bqd"}> : () -> ()
    %cst_55 = arith.constant dense<0.000000e+00> : vector<2x8x4xf32>
    %173 = tpu.matmul %172, %159, %cst_55 {dimension_numbers = #tpu.dot_dimension_numbers<[2], [1], [1], [2], [0, 0, 0, 1, 1, 2], [0], [0]>} : vector<2x8x8xbf16>, vector<2x8x4xbf16>, vector<2x8x4xf32> -> vector<2x8x4xf32>
    "tpu.trace_stop"() : () -> ()
    %174 = vector.shape_cast %173 : vector<2x8x4xf32> to vector<16x4xf32>
    %175 = arith.truncf %174 : vector<16x4xf32> to vector<16x4xbf16>
    %c6 = arith.constant 6 : index
    %c0_56 = arith.constant 0 : index
    %c0_57 = arith.constant 0 : index
    %176 = vector.load %arg4[%c6, %c0_56, %c0_57] : memref<8x4x32xbf16, #tpu.memory_space<vmem>>, vector<1x4x32xbf16>
    %177 = vector.shape_cast %176 : vector<1x4x32xbf16> to vector<4x32xbf16>
    %cst_58 = arith.constant dense<0.000000e+00> : vector<16x32xf32>
    %178 = tpu.matmul %175, %177, %cst_58 {dimension_numbers = #tpu.dot_dimension_numbers<[1], [0], [0], [1], [0, 0, 1, 1], [], []>} : vector<16x4xbf16>, vector<4x32xbf16>, vector<16x32xf32> -> vector<16x32xf32>
    %179 = arith.addf %156, %178 : vector<16x32xf32>
    %180 = vector.extract_strided_slice %6 {offsets = [0, 0, 28], sizes = [2, 8, 4], strides = [1, 1, 1]} : vector<2x8x32xbf16> to vector<2x8x4xbf16>
    %181 = vector.extract_strided_slice %9 {offsets = [0, 0, 28], sizes = [2, 8, 4], strides = [1, 1, 1]} : vector<2x8x32xbf16> to vector<2x8x4xbf16>
    %182 = vector.extract_strided_slice %12 {offsets = [0, 0, 28], sizes = [2, 8, 4], strides = [1, 1, 1]} : vector<2x8x32xbf16> to vector<2x8x4xbf16>
    "tpu.trace_start"() <{level = 10 : i32, message = "bqd,bkd->bqk"}> : () -> ()
    %cst_59 = arith.constant dense<0.000000e+00> : vector<2x8x8xf32>
    %183 = tpu.matmul %180, %181, %cst_59 {dimension_numbers = #tpu.dot_dimension_numbers<[2], [2], [1], [1], [0, 0, 0, 1, 1, 1], [0], [0]>} : vector<2x8x4xbf16>, vector<2x8x4xbf16>, vector<2x8x8xf32> -> vector<2x8x8xf32>
    "tpu.trace_stop"() : () -> ()
    %184 = arith.addf %183, %15 : vector<2x8x8xf32>
    %cst_60 = arith.constant dense<0xFF800000> : vector<2x8xf32>
    %185 = vector.multi_reduction <maximumf>, %184, %cst_60 [2] : vector<2x8x8xf32> to vector<2x8xf32>
    %186 = vector.shape_cast %185 : vector<2x8xf32> to vector<2x8x1xf32>
    %187 = vector.broadcast %186 : vector<2x8x1xf32> to vector<2x8x8xf32>
    %188 = arith.subf %184, %187 : vector<2x8x8xf32>
    %189 = math.exp %188 : vector<2x8x8xf32>
    %cst_61 = arith.constant dense<0.000000e+00> : vector<2x8xf32>
    %190 = vector.multi_reduction <add>, %189, %cst_61 [2] : vector<2x8x8xf32> to vector<2x8xf32>
    %191 = vector.shape_cast %190 : vector<2x8xf32> to vector<2x8x1xf32>
    %192 = tpu.reciprocal %191 {approx = true} : vector<2x8x1xf32> -> vector<2x8x1xf32>
    %193 = vector.broadcast %192 : vector<2x8x1xf32> to vector<2x8x8xf32>
    %194 = arith.mulf %189, %193 : vector<2x8x8xf32>
    %195 = arith.truncf %194 : vector<2x8x8xf32> to vector<2x8x8xbf16>
    "tpu.trace_start"() <{level = 10 : i32, message = "bqk,bkd->bqd"}> : () -> ()
    %cst_62 = arith.constant dense<0.000000e+00> : vector<2x8x4xf32>
    %196 = tpu.matmul %195, %182, %cst_62 {dimension_numbers = #tpu.dot_dimension_numbers<[2], [1], [1], [2], [0, 0, 0, 1, 1, 2], [0], [0]>} : vector<2x8x8xbf16>, vector<2x8x4xbf16>, vector<2x8x4xf32> -> vector<2x8x4xf32>
    "tpu.trace_stop"() : () -> ()
    %197 = vector.shape_cast %196 : vector<2x8x4xf32> to vector<16x4xf32>
    %198 = arith.truncf %197 : vector<16x4xf32> to vector<16x4xbf16>
    %c7 = arith.constant 7 : index
    %c0_63 = arith.constant 0 : index
    %c0_64 = arith.constant 0 : index
    %199 = vector.load %arg4[%c7, %c0_63, %c0_64] : memref<8x4x32xbf16, #tpu.memory_space<vmem>>, vector<1x4x32xbf16>
    %200 = vector.shape_cast %199 : vector<1x4x32xbf16> to vector<4x32xbf16>
    %cst_65 = arith.constant dense<0.000000e+00> : vector<16x32xf32>
    %201 = tpu.matmul %198, %200, %cst_65 {dimension_numbers = #tpu.dot_dimension_numbers<[1], [0], [0], [1], [0, 0, 1, 1], [], []>} : vector<16x4xbf16>, vector<4x32xbf16>, vector<16x32xf32> -> vector<16x32xf32>
    %202 = arith.addf %179, %201 : vector<16x32xf32>
    %203 = vector.shape_cast %202 : vector<16x32xf32> to vector<2x8x32xf32>
    %c0_66 = arith.constant 0 : index
    %c0_67 = arith.constant 0 : index
    %c0_68 = arith.constant 0 : index
    %204 = vector.load %arg6[%c0_66, %c0_67, %c0_68] : memref<2x8x32xf32, #tpu.memory_space<vmem>>, vector<2x8x32xf32>
    tpu.vector_store %arg6[%c0_66, %c0_67, %c0_68], %203 {strides = array<i32>} : memref<2x8x32xf32, #tpu.memory_space<vmem>>, vector<2x8x32xf32>,
    return
  }
  func.func @transform_0(%arg0: i32) -> (i32, i32, i32) {
    %c0_i32 = arith.constant 0 : i32
    %c0_i32_0 = arith.constant 0 : i32
    %c0_i32_1 = arith.constant 0 : i32
    return %arg0, %c0_i32, %c0_i32_0 : i32, i32, i32
  }
  func.func @transform_1(%arg0: i32) -> (i32, i32, i32) {
    %c0_i32 = arith.constant 0 : i32
    %c0_i32_0 = arith.constant 0 : i32
    %c0_i32_1 = arith.constant 0 : i32
    return %arg0, %c0_i32, %c0_i32_0 : i32, i32, i32
  }
  func.func @transform_2(%arg0: i32) -> (i32, i32) {
    %c0_i32 = arith.constant 0 : i32
    %c0_i32_0 = arith.constant 0 : i32
    %c0_i32_1 = arith.constant 0 : i32
    return %c0_i32, %c0_i32_0 : i32, i32
  }
  func.func @transform_3(%arg0: i32) -> (i32, i32, i32) {
    %c0_i32 = arith.constant 0 : i32
    %c0_i32_0 = arith.constant 0 : i32
    %c0_i32_1 = arith.constant 0 : i32
    %c0_i32_2 = arith.constant 0 : i32
    return %c0_i32, %c0_i32_0, %c0_i32_1 : i32, i32, i32
  }
  func.func @transform_4(%arg0: i32) -> (i32, i32) {
    %c0_i32 = arith.constant 0 : i32
    %c0_i32_0 = arith.constant 0 : i32
    %c0_i32_1 = arith.constant 0 : i32
    return %c0_i32, %c0_i32_0 : i32, i32
  }
  func.func @transform_5(%arg0: i32) -> (i32, i32, i32) {
    %c0_i32 = arith.constant 0 : i32
    %c0_i32_0 = arith.constant 0 : i32
    %c0_i32_1 = arith.constant 0 : i32
    return %arg0, %c0_i32, %c0_i32_0 : i32, i32, i32
  }
}

</mosaic_0001>

<llo_original>
// kernel: tpu_custom_call.1
$region0: #{tpu_custom_call.1}
  #allocation0 [shape = 'u32[]', space=smem, size = 0x4, offset = 0x4, fixed_abs, tag = 'smem constant byte address 0x4 - core index']
  #allocation1 [shape = 'u32[144,128]{1,0:T(1,128)}', space=vmem, size = 0x12000, scoped, tag = 'internal scratch']
  %s0 = inlined_call_operand.hbm [shape: bf16[2,8,32], index: 0, kind: input, shape index: {}]
  %s1 = inlined_call_operand.vmem [shape: f32[2,1,8], index: 1, kind: input, shape index: {}]
  %s2 = inlined_call_operand.hbm [shape: bf16[32,96], index: 2, kind: input, shape index: {}]
  %s3 = inlined_call_operand.hbm [shape: bf16[8,4,32], index: 3, kind: input, shape index: {}]
  %s4 = inlined_call_operand.vmem [shape: f32[1,32], index: 4, kind: input, shape index: {}]
  %s5 = inlined_call_operand.hbm [shape: f32[2,8,32], index: 5, kind: output, shape index: {}]
  %s6 = sld [smem:[#allocation0]]
  $region42: #{tpu_custom_call.1} parent=0
    _
  %s8 = ssub.s32 1, %s6
  %s9 = scalar_select 0, %s8, %s6
  $region1: #{tpu_custom_call.1} parent=0
    #allocation2 [shape = 'u8[4096]{0}', space=vmem, size = 0x1000, scoped, tag = 'input window, operand 0, single buffered']
    #allocation3 [shape = 's32[1]{0}', space=sflag, size = 0x4, scoped, tag = 'scoped memory for tpu_custom_call.1']
    #allocation4 [shape = 's32[1]{0}', space=sflag, size = 0x4, scoped, tag = 'scoped memory for tpu_custom_call.1']
    #allocation5 [shape = 'u8[8192]{0}', space=vmem, size = 0x2000, scoped, tag = 'input window, operand 2, single buffered']
    #allocation6 [shape = 's32[1]{0}', space=sflag, size = 0x4, scoped, tag = 'scoped memory for tpu_custom_call.1']
    #allocation7 [shape = 'u8[8192]{0}', space=vmem, size = 0x2000, scoped, tag = 'input window, operand 3, single buffered']
    #allocation8 [shape = 'u8[8192]{0}', space=vmem, size = 0x2000, scoped, tag = 'output window, operand 0, single buffered']
    %10 = vsyncpa [#allocation3], 0
    %11 = vsyncpa [#allocation6], 0
    %12 = vsyncpa [#allocation4], 0
    // Predicated region
    $region2: #{tpu_custom_call.1} parent=1 // pred_check
      _
    $region3: #{tpu_custom_call.1} parent=1 // pred_check_branch
      %14 = sbr.rel (0) target = $region5
    $region4: #{tpu_custom_call.1} parent=1 // pred_region
      %s16 = ssub.s32 128, 128
      %17 = vsyncadd [#allocation3], %s16
      %s18 = sshll.u32 [#allocation2], 4
      %s19 = int_to_ptr.vmem [resolvable:$true] %s18
      %24 = dma.hbm_to_vmem [thread:$0]  %s0, 128, %s19, [#allocation3], 64, 64, 4
    $region5: #{tpu_custom_call.1} parent=1 // pred_fallthru
      _
    // Predicated region
    $region6: #{tpu_custom_call.1} parent=1 // pred_check
      _
    $region7: #{tpu_custom_call.1} parent=1 // pred_check_branch
      %26 = sbr.rel (0) target = $region9
    $region8: #{tpu_custom_call.1} parent=1 // pred_region
      _
    $region9: #{tpu_custom_call.1} parent=1 // pred_fallthru
      _
    // Predicated region
    $region10: #{tpu_custom_call.1} parent=1 // pred_check
      _
    $region11: #{tpu_custom_call.1} parent=1 // pred_check_branch
      %28 = sbr.rel (0) target = $region13
    $region12: #{tpu_custom_call.1} parent=1 // pred_region
      %s30 = ssub.s32 256, 256
      %31 = vsyncadd [#allocation6], %s30
      %s32 = sshll.u32 [#allocation5], 4
      %s33 = int_to_ptr.vmem [resolvable:$true] %s32
      %38 = dma.hbm_to_vmem [thread:$0]  %s2, 256, %s33, [#allocation6], 64, 64, 4
    $region13: #{tpu_custom_call.1} parent=1 // pred_fallthru
      _
    // Predicated region
    $region14: #{tpu_custom_call.1} parent=1 // pred_check
      _
    $region15: #{tpu_custom_call.1} parent=1 // pred_check_branch
      %40 = sbr.rel (0) target = $region17
    $region16: #{tpu_custom_call.1} parent=1 // pred_region
      %s42 = ssub.s32 256, 256
      %43 = vsyncadd [#allocation6], %s42
      %s44 = sshll.u32 [#allocation7], 4
      %s45 = int_to_ptr.vmem [resolvable:$true] %s44
      %50 = dma.hbm_to_vmem [thread:$0]  %s3, 256, %s45, [#allocation6], 32, 32, 2
    $region17: #{tpu_custom_call.1} parent=1 // pred_fallthru
      _
    // Predicated region
    $region18: #{tpu_custom_call.1} parent=1 // pred_check
      _
    $region19: #{tpu_custom_call.1} parent=1 // pred_check_branch
      %52 = sbr.rel (0) target = $region21
    $region20: #{tpu_custom_call.1} parent=1 // pred_region
      _
    $region21: #{tpu_custom_call.1} parent=1 // pred_fallthru
      _
    // Predicated region
    $region22: #{tpu_custom_call.1} parent=1 // pred_check
      _
    $region23: #{tpu_custom_call.1} parent=1 // pred_check_branch
      %54 = sbr.rel (0) target = $region25
    $region24: #{tpu_custom_call.1} parent=1 // pred_region
      %55 = dma.done [#allocation3], 128
    $region25: #{tpu_custom_call.1} parent=1 // pred_fallthru
      _
    // Predicated region
    $region26: #{tpu_custom_call.1} parent=1 // pred_check
      _
    $region27: #{tpu_custom_call.1} parent=1 // pred_check_branch
      %57 = sbr.rel (0) target = $region29
    $region28: #{tpu_custom_call.1} parent=1 // pred_region
      %58 = dma.done [#allocation6], 256
    $region29: #{tpu_custom_call.1} parent=1 // pred_fallthru
      _
    // Predicated region
    $region30: #{tpu_custom_call.1} parent=1 // pred_check
      _
    $region31: #{tpu_custom_call.1} parent=1 // pred_check_branch
      %60 = sbr.rel (0) target = $region33
    $region32: #{tpu_custom_call.1} parent=1 // pred_region
      %61 = dma.done [#allocation6], 256
    $region33: #{tpu_custom_call.1} parent=1 // pred_fallthru
      _
    %v63 = vld [vmem:[#allocation2] sm:$0xf]
    %v64 = vld [vmem:[#allocation2 + $0x4] sm:$0xf]
    %v65 = vld [vmem:[#allocation5] sm:$0xf]
    %v66 = vld [vmem:[#allocation5 + $0x4] sm:$0xf]
    %v67 = vld [vmem:[#allocation5 + $0x8] sm:$0xf]
    %v68 = vld [vmem:[#allocation5 + $0xc] sm:$0xf]
    %v71 = vunpack.c.l.b16 %v63
    %v72 = vunpack.c.l.b16 %v64
    %v73 = vpack.c.b16 %v72, %v71
    %v78 = vunpack.c.l.b16 %v65
    %v79 = vunpack.c.l.b16 %v66
    %v80 = vunpack.c.l.b16 %v67
    %v81 = vunpack.c.l.b16 %v68
    %v82 = vpack.c.b16 %v79, %v78
    %v83 = vpack.c.b16 %v81, %v80
    %vm86 = vcmask 261120
    %v88 = vsel %vm86, %v73, 0
    %90 = vmatprep.subr.bf16.mxu0 0
    %91 = vmatpush1.bf16.msra.mxu0 %v82
    %92 = vmatprep.subr.bf16.mxu0 0
    %93 = vmatpush1.bf16.msra.mxu0 %v83
    %94 = vmatprep.subr.bf16.mxu0 0
    %95 = vmatpush1.bf16.msra.mxu0 0
    %96 = vmatprep.subr.bf16.mxu0 0
    %97 = vmatpush1.bf16.msra.mxu0 0
    %98 = vmatprep.subr.bf16.mxu0 0
    %99 = vmatpush1.bf16.msra.mxu0 0
    %100 = vmatprep.subr.bf16.mxu0 0
    %101 = vmatpush1.bf16.msra.mxu0 0
    %102 = vmatprep.subr.bf16.mxu0 0
    %103 = vmatpush1.bf16.msra.mxu0 0
    %104 = vmatprep.subr.bf16.mxu0 0
    %105 = vmatpush1.bf16.msra.mxu0 0
    %106 = vmatprep.subr.bf16.mxu0 0
    %107 = vmatpush1.bf16.msra.mxu0 0
    %108 = vmatprep.subr.bf16.mxu0 0
    %109 = vmatpush1.bf16.msra.mxu0 0
    %110 = vmatprep.subr.bf16.mxu0 0
    %111 = vmatpush1.bf16.msra.mxu0 0
    %112 = vmatprep.subr.bf16.mxu0 0
    %113 = vmatpush1.bf16.msra.mxu0 0
    %114 = vmatprep.subr.bf16.mxu0 0
    %115 = vmatpush1.bf16.msra.mxu0 0
    %116 = vmatprep.subr.bf16.mxu0 0
    %117 = vmatpush1.bf16.msra.mxu0 0
    %118 = vmatprep.subr.bf16.mxu0 0
    %119 = vmatpush1.bf16.msra.mxu0 0
    %120 = vmatprep.subr.bf16.mxu0 0
    %121 = vmatpush1.bf16.msra.mxu0 0
    %122 = vmatprep.mubr.bf16.mxu0 0
    %123 = vmatmul.mubr.bf16.gmra.mrb[0].mxu0 %v88
    %v124 = vpop.f32.mrb[0].mxu0
    %v125 = vadd.f32 0.0, %v124
    %v126 = vpop.f32.mrb[0].mxu0
    %v127 = vpop.f32.mrb[0].mxu0
    %v128 = vadd.f32 0.0, %v127
    %v129 = vpop.f32.mrb[0].mxu0
    %130 = vdwg.mxu0
    %v131 = vpack.c.bf16 %v128, %v125
    %v133 = vunpack.c.l.b16 %v131
    %v134 = vunpack.c.h.b16 %v131
    %v135 = vpack.c.b16 %v133, %v133
    %v136 = vpack.c.b16 %v134, %v134
    %v137 = vld [vmem:[%s1] sm:$0x1]
    %v138 = vld [vmem:[%s1 + $0x1] sm:$0x1]
    %v141 = vlaneseq
    %v142 = vshrl.u32 %v141, 7
    %v143 = vsub.s32 0, %v142
    %v144 = vrot.slane %v137, %v143
    %v145 = vlaneseq
    %v146 = vshrl.u32 %v145, 7
    %v147 = vsub.s32 0, %v146
    %v148 = vrot.slane %v138, %v147
    %v151 = vld [vmem:[%s4] sm:$0x1]
    %v153 = vlaneseq
    %v154 = vshrl.u32 %v153, 7
    %v155 = vsub.s32 0, %v154
    %v156 = vrot.slane %v151, %v155
    %158 = vrot.lane.b32.xlu0 %v135, 96
    %v159 = vpop.permute.xlu0 %158
    %vm160 = vcmask 31744
    %v162 = vsel %vm160, %v135, 0
    %v165 = vsel %vm160, %v159, 0
    %167 = vmatprep.subr.bf16.mxu0 0
    %168 = vmatpush1.bf16.xpose.msra.mxu0 %v165
    %169 = vmatprep.subr.bf16.mxu0 0
    %170 = vmatpush1.bf16.xpose.msra.mxu0 0
    %171 = vmatprep.subr.bf16.mxu0 0
    %172 = vmatpush1.bf16.xpose.msra.mxu0 0
    %173 = vmatprep.subr.bf16.mxu0 0
    %174 = vmatpush1.bf16.xpose.msra.mxu0 0
    %175 = vmatprep.subr.bf16.mxu0 0
    %176 = vmatpush1.bf16.xpose.msra.mxu0 0
    %177 = vmatprep.subr.bf16.mxu0 0
    %178 = vmatpush1.bf16.xpose.msra.mxu0 0
    %179 = vmatprep.subr.bf16.mxu0 0
    %180 = vmatpush1.bf16.xpose.msra.mxu0 0
    %181 = vmatprep.subr.bf16.mxu0 0
    %182 = vmatpush1.bf16.xpose.msra.mxu0 0
    %183 = vmatprep.subr.bf16.mxu0 0
    %184 = vmatpush1.bf16.xpose.msra.mxu0 0
    %185 = vmatprep.subr.bf16.mxu0 0
    %186 = vmatpush1.bf16.xpose.msra.mxu0 0
    %187 = vmatprep.subr.bf16.mxu0 0
    %188 = vmatpush1.bf16.xpose.msra.mxu0 0
    %189 = vmatprep.subr.bf16.mxu0 0
    %190 = vmatpush1.bf16.xpose.msra.mxu0 0
    %191 = vmatprep.subr.bf16.mxu0 0
    %192 = vmatpush1.bf16.xpose.msra.mxu0 0
    %193 = vmatprep.subr.bf16.mxu0 0
    %194 = vmatpush1.bf16.xpose.msra.mxu0 0
    %195 = vmatprep.subr.bf16.mxu0 0
    %196 = vmatpush1.bf16.xpose.msra.mxu0 0
    %197 = vmatprep.subr.bf16.mxu0 0
    %198 = vmatpush1.bf16.xpose.msra.mxu0 0
    %199 = vmatprep.mubr.bf16.mxu0 0
    %200 = vmatmul.mubr.bf16.gmra.mrb[0].mxu0 %v162
    %v201 = vpop.f32.mrb[0].mxu0
    %v202 = vadd.f32 %v144, %v201
    %v203 = vpop.f32.mrb[0].mxu0
    %v204 = vpop.f32.mrb[0].mxu0
    %v205 = vpop.f32.mrb[0].mxu0
    %206 = vdwg.mxu0
    %207 = vrot.lane.b32.xlu0 %v136, 96
    %v208 = vpop.permute.xlu0 %207
    %v210 = vsel %vm160, %v136, 0
    %v213 = vsel %vm160, %v208, 0
    %215 = vmatprep.subr.bf16.mxu0 0
    %216 = vmatpush1.bf16.xpose.msra.mxu0 %v213
    %217 = vmatprep.subr.bf16.mxu0 0
    %218 = vmatpush1.bf16.xpose.msra.mxu0 0
    %219 = vmatprep.subr.bf16.mxu0 0
    %220 = vmatpush1.bf16.xpose.msra.mxu0 0
    %221 = vmatprep.subr.bf16.mxu0 0
    %222 = vmatpush1.bf16.xpose.msra.mxu0 0
    %223 = vmatprep.subr.bf16.mxu0 0
    %224 = vmatpush1.bf16.xpose.msra.mxu0 0
    %225 = vmatprep.subr.bf16.mxu0 0
    %226 = vmatpush1.bf16.xpose.msra.mxu0 0
    %227 = vmatprep.subr.bf16.mxu0 0
    %228 = vmatpush1.bf16.xpose.msra.mxu0 0
    %229 = vmatprep.subr.bf16.mxu0 0
    %230 = vmatpush1.bf16.xpose.msra.mxu0 0
    %231 = vmatprep.subr.bf16.mxu0 0
    %232 = vmatpush1.bf16.xpose.msra.mxu0 0
    %233 = vmatprep.subr.bf16.mxu0 0
    %234 = vmatpush1.bf16.xpose.msra.mxu0 0
    %235 = vmatprep.subr.bf16.mxu0 0
    %236 = vmatpush1.bf16.xpose.msra.mxu0 0
    %237 = vmatprep.subr.bf16.mxu0 0
    %238 = vmatpush1.bf16.xpose.msra.mxu0 0
    %239 = vmatprep.subr.bf16.mxu0 0
    %240 = vmatpush1.bf16.xpose.msra.mxu0 0
    %241 = vmatprep.subr.bf16.mxu0 0
    %242 = vmatpush1.bf16.xpose.msra.mxu0 0
    %243 = vmatprep.subr.bf16.mxu0 0
    %244 = vmatpush1.bf16.xpose.msra.mxu0 0
    %245 = vmatprep.subr.bf16.mxu0 0
    %246 = vmatpush1.bf16.xpose.msra.mxu0 0
    %247 = vmatprep.mubr.bf16.mxu0 0
    %248 = vmatmul.mubr.bf16.gmra.mrb[0].mxu0 %v210
    %v249 = vpop.f32.mrb[0].mxu0
    %v250 = vadd.f32 %v148, %v249
    %v251 = vpop.f32.mrb[0].mxu0
    %v252 = vpop.f32.mrb[0].mxu0
    %v253 = vpop.f32.mrb[0].mxu0
    %254 = vdwg.mxu0
    %vm255 = vcmask 64512
    %v256 = vsel %vm255, %v202, -inf
    %257 = vmax.xlane.f32.xlu0 %v256
    %v258 = vpop.xlane.xlu0 %257
    %v259 = vsel %vm255, %v250, -inf
    %260 = vmax.xlane.f32.xlu0 %v259
    %v261 = vpop.xlane.xlu0 %260
    %v262 = vsub.f32 %v202, %v258
    %v263 = vsub.f32 %v250, %v261
    %v264 = vmul.f32 %v262, 1.442695
    %v265 = vpow.pop %v264
    %v266 = vmul.f32 %v263, 1.442695
    %v267 = vpow.pop %v266
    %v268 = vsel %vm255, %v265, 0.0
    %269 = vadd.xlane.f32.xlu0 %v268
    %v270 = vpop.xlane.xlu0 %269
    %v271 = vsel %vm255, %v267, 0.0
    %272 = vadd.xlane.f32.xlu0 %v271
    %v273 = vpop.xlane.xlu0 %272
    %v274 = vrcp.pop %v270
    %v275 = vrcp.pop %v273
    %v276 = vmul.f32 %v265, %v274
    %v277 = vmul.f32 %v267, %v275
    %v278 = vpack.c.bf16 %v276, %v276
    %v279 = vpack.c.bf16 %v277, %v277
    %280 = vrot.lane.b32.xlu0 %v135, 64
    %v281 = vpop.permute.xlu0 %280
    %v283 = vsel %vm255, %v278, 0
    %vm285 = vcmask 1043456
    %v287 = vsel %vm285, %v281, 0
    %289 = vmatprep.subr.bf16.mxu0 0
    %290 = vmatpush1.bf16.msra.mxu0 %v287
    %291 = vmatprep.subr.bf16.mxu0 0
    %292 = vmatpush1.bf16.msra.mxu0 0
    %293 = vmatprep.subr.bf16.mxu0 0
    %294 = vmatpush1.bf16.msra.mxu0 0
    %295 = vmatprep.subr.bf16.mxu0 0
    %296 = vmatpush1.bf16.msra.mxu0 0
    %297 = vmatprep.subr.bf16.mxu0 0
    %298 = vmatpush1.bf16.msra.mxu0 0
    %299 = vmatprep.subr.bf16.mxu0 0
    %300 = vmatpush1.bf16.msra.mxu0 0
    %301 = vmatprep.subr.bf16.mxu0 0
    %302 = vmatpush1.bf16.msra.mxu0 0
    %303 = vmatprep.subr.bf16.mxu0 0
    %304 = vmatpush1.bf16.msra.mxu0 0
    %305 = vmatprep.subr.bf16.mxu0 0
    %306 = vmatpush1.bf16.msra.mxu0 0
    %307 = vmatprep.subr.bf16.mxu0 0
    %308 = vmatpush1.bf16.msra.mxu0 0
    %309 = vmatprep.subr.bf16.mxu0 0
    %310 = vmatpush1.bf16.msra.mxu0 0
    %311 = vmatprep.subr.bf16.mxu0 0
    %312 = vmatpush1.bf16.msra.mxu0 0
    %313 = vmatprep.subr.bf16.mxu0 0
    %314 = vmatpush1.bf16.msra.mxu0 0
    %315 = vmatprep.subr.bf16.mxu0 0
    %316 = vmatpush1.bf16.msra.mxu0 0
    %317 = vmatprep.subr.bf16.mxu0 0
    %318 = vmatpush1.bf16.msra.mxu0 0
    %319 = vmatprep.subr.bf16.mxu0 0
    %320 = vmatpush1.bf16.msra.mxu0 0
    %321 = vmatprep.mubr.bf16.mxu0 0
    %322 = vmatmul.mubr.bf16.gmra.mrb[0].mxu0 %v283
    %v323 = vpop.f32.mrb[0].mxu0
    %v324 = vadd.f32 0.0, %v323
    %v325 = vpop.f32.mrb[0].mxu0
    %v326 = vpop.f32.mrb[0].mxu0
    %v327 = vpop.f32.mrb[0].mxu0
    %328 = vdwg.mxu0
    %329 = vrot.lane.b32.xlu0 %v136, 64
    %v330 = vpop.permute.xlu0 %329
    %v332 = vsel %vm255, %v279, 0
    %v335 = vsel %vm285, %v330, 0
    %337 = vmatprep.subr.bf16.mxu0 0
    %338 = vmatpush1.bf16.msra.mxu0 %v335
    %339 = vmatprep.subr.bf16.mxu0 0
    %340 = vmatpush1.bf16.msra.mxu0 0
    %341 = vmatprep.subr.bf16.mxu0 0
    %342 = vmatpush1.bf16.msra.mxu0 0
    %343 = vmatprep.subr.bf16.mxu0 0
    %344 = vmatpush1.bf16.msra.mxu0 0
    %345 = vmatprep.subr.bf16.mxu0 0
    %346 = vmatpush1.bf16.msra.mxu0 0
    %347 = vmatprep.subr.bf16.mxu0 0
    %348 = vmatpush1.bf16.msra.mxu0 0
    %349 = vmatprep.subr.bf16.mxu0 0
    %350 = vmatpush1.bf16.msra.mxu0 0
    %351 = vmatprep.subr.bf16.mxu0 0
    %352 = vmatpush1.bf16.msra.mxu0 0
    %353 = vmatprep.subr.bf16.mxu0 0
    %354 = vmatpush1.bf16.msra.mxu0 0
    %355 = vmatprep.subr.bf16.mxu0 0
    %356 = vmatpush1.bf16.msra.mxu0 0
    %357 = vmatprep.subr.bf16.mxu0 0
    %358 = vmatpush1.bf16.msra.mxu0 0
    %359 = vmatprep.subr.bf16.mxu0 0
    %360 = vmatpush1.bf16.msra.mxu0 0
    %361 = vmatprep.subr.bf16.mxu0 0
    %362 = vmatpush1.bf16.msra.mxu0 0
    %363 = vmatprep.subr.bf16.mxu0 0
    %364 = vmatpush1.bf16.msra.mxu0 0
    %365 = vmatprep.subr.bf16.mxu0 0
    %366 = vmatpush1.bf16.msra.mxu0 0
    %367 = vmatprep.subr.bf16.mxu0 0
    %368 = vmatpush1.bf16.msra.mxu0 0
    %369 = vmatprep.mubr.bf16.mxu0 0
    %370 = vmatmul.mubr.bf16.gmra.mrb[0].mxu0 %v332
    %v371 = vpop.f32.mrb[0].mxu0
    %v372 = vadd.f32 0.0, %v371
    %v373 = vpop.f32.mrb[0].mxu0
    %v374 = vpop.f32.mrb[0].mxu0
    %v375 = vpop.f32.mrb[0].mxu0
    %376 = vdwg.mxu0
    %v377 = vpack.c.bf16 %v372, %v324
    %v378 = vld [vmem:[#allocation7] sm:$0x3]
    %v380 = vsel %vm160, %v377, 0
    %vm382 = vcmask 1041408
    %v384 = vsel %vm382, %v378, 0
    %386 = vmatprep.subr.bf16.mxu0 0
    %387 = vmatpush1.bf16.msra.mxu0 %v384
    %388 = vmatprep.subr.bf16.mxu0 0
    %389 = vmatpush1.bf16.msra.mxu0 0
    %390 = vmatprep.subr.bf16.mxu0 0
    %391 = vmatpush1.bf16.msra.mxu0 0
    %392 = vmatprep.subr.bf16.mxu0 0
    %393 = vmatpush1.bf16.msra.mxu0 0
    %394 = vmatprep.subr.bf16.mxu0 0
    %395 = vmatpush1.bf16.msra.mxu0 0
    %396 = vmatprep.subr.bf16.mxu0 0
    %397 = vmatpush1.bf16.msra.mxu0 0
    %398 = vmatprep.subr.bf16.mxu0 0
    %399 = vmatpush1.bf16.msra.mxu0 0
    %400 = vmatprep.subr.bf16.mxu0 0
    %401 = vmatpush1.bf16.msra.mxu0 0
    %402 = vmatprep.subr.bf16.mxu0 0
    %403 = vmatpush1.bf16.msra.mxu0 0
    %404 = vmatprep.subr.bf16.mxu0 0
    %405 = vmatpush1.bf16.msra.mxu0 0
    %406 = vmatprep.subr.bf16.mxu0 0
    %407 = vmatpush1.bf16.msra.mxu0 0
    %408 = vmatprep.subr.bf16.mxu0 0
    %409 = vmatpush1.bf16.msra.mxu0 0
    %410 = vmatprep.subr.bf16.mxu0 0
    %411 = vmatpush1.bf16.msra.mxu0 0
    %412 = vmatprep.subr.bf16.mxu0 0
    %413 = vmatpush1.bf16.msra.mxu0 0
    %414 = vmatprep.subr.bf16.mxu0 0
    %415 = vmatpush1.bf16.msra.mxu0 0
    %416 = vmatprep.subr.bf16.mxu0 0
    %417 = vmatpush1.bf16.msra.mxu0 0
    %418 = vmatprep.mubr.bf16.mxu0 0
    %419 = vmatmul.mubr.bf16.gmra.mrb[0].mxu0 %v380
    %v420 = vpop.f32.mrb[0].mxu0
    %v421 = vadd.f32 0.0, %v420
    %v422 = vpop.f32.mrb[0].mxu0
    %v423 = vpop.f32.mrb[0].mxu0
    %v424 = vadd.f32 0.0, %v423
    %v425 = vpop.f32.mrb[0].mxu0
    %426 = vdwg.mxu0
    %v427 = vadd.f32 %v156, %v421
    %v428 = vadd.f32 %v156, %v424
    %429 = vrot.lane.b32.xlu0 %v135, 124
    %v430 = vpop.permute.xlu0 %429
    %431 = vrot.lane.b32.xlu0 %v135, 92
    %v432 = vpop.permute.xlu0 %431
    %v434 = vsel %vm160, %v430, 0
    %v437 = vsel %vm160, %v432, 0
    %439 = vmatprep.subr.bf16.mxu0 0
    %440 = vmatpush1.bf16.xpose.msra.mxu0 %v437
    %441 = vmatprep.subr.bf16.mxu0 0
    %442 = vmatpush1.bf16.xpose.msra.mxu0 0
    %443 = vmatprep.subr.bf16.mxu0 0
    %444 = vmatpush1.bf16.xpose.msra.mxu0 0
    %445 = vmatprep.subr.bf16.mxu0 0
    %446 = vmatpush1.bf16.xpose.msra.mxu0 0
    %447 = vmatprep.subr.bf16.mxu0 0
    %448 = vmatpush1.bf16.xpose.msra.mxu0 0
    %449 = vmatprep.subr.bf16.mxu0 0
    %450 = vmatpush1.bf16.xpose.msra.mxu0 0
    %451 = vmatprep.subr.bf16.mxu0 0
    %452 = vmatpush1.bf16.xpose.msra.mxu0 0
    %453 = vmatprep.subr.bf16.mxu0 0
    %454 = vmatpush1.bf16.xpose.msra.mxu0 0
    %455 = vmatprep.subr.bf16.mxu0 0
    %456 = vmatpush1.bf16.xpose.msra.mxu0 0
    %457 = vmatprep.subr.bf16.mxu0 0
    %458 = vmatpush1.bf16.xpose.msra.mxu0 0
    %459 = vmatprep.subr.bf16.mxu0 0
    %460 = vmatpush1.bf16.xpose.msra.mxu0 0
    %461 = vmatprep.subr.bf16.mxu0 0
    %462 = vmatpush1.bf16.xpose.msra.mxu0 0
    %463 = vmatprep.subr.bf16.mxu0 0
    %464 = vmatpush1.bf16.xpose.msra.mxu0 0
    %465 = vmatprep.subr.bf16.mxu0 0
    %466 = vmatpush1.bf16.xpose.msra.mxu0 0
    %467 = vmatprep.subr.bf16.mxu0 0
    %468 = vmatpush1.bf16.xpose.msra.mxu0 0
    %469 = vmatprep.subr.bf16.mxu0 0
    %470 = vmatpush1.bf16.xpose.msra.mxu0 0
    %471 = vmatprep.mubr.bf16.mxu0 0
    %472 = vmatmul.mubr.bf16.gmra.mrb[0].mxu0 %v434
    %v473 = vpop.f32.mrb[0].mxu0
    %v474 = vadd.f32 %v144, %v473
    %v475 = vpop.f32.mrb[0].mxu0
    %v476 = vpop.f32.mrb[0].mxu0
    %v477 = vpop.f32.mrb[0].mxu0
    %478 = vdwg.mxu0
    %479 = vrot.lane.b32.xlu0 %v136, 124
    %v480 = vpop.permute.xlu0 %479
    %481 = vrot.lane.b32.xlu0 %v136, 92
    %v482 = vpop.permute.xlu0 %481
    %v484 = vsel %vm160, %v480, 0
    %v487 = vsel %vm160, %v482, 0
    %489 = vmatprep.subr.bf16.mxu0 0
    %490 = vmatpush1.bf16.xpose.msra.mxu0 %v487
    %491 = vmatprep.subr.bf16.mxu0 0
    %492 = vmatpush1.bf16.xpose.msra.mxu0 0
    %493 = vmatprep.subr.bf16.mxu0 0
    %494 = vmatpush1.bf16.xpose.msra.mxu0 0
    %495 = vmatprep.subr.bf16.mxu0 0
    %496 = vmatpush1.bf16.xpose.msra.mxu0 0
    %497 = vmatprep.subr.bf16.mxu0 0
    %498 = vmatpush1.bf16.xpose.msra.mxu0 0
    %499 = vmatprep.subr.bf16.mxu0 0
    %500 = vmatpush1.bf16.xpose.msra.mxu0 0
    %501 = vmatprep.subr.bf16.mxu0 0
    %502 = vmatpush1.bf16.xpose.msra.mxu0 0
    %503 = vmatprep.subr.bf16.mxu0 0
    %504 = vmatpush1.bf16.xpose.msra.mxu0 0
    %505 = vmatprep.subr.bf16.mxu0 0
    %506 = vmatpush1.bf16.xpose.msra.mxu0 0
    %507 = vmatprep.subr.bf16.mxu0 0
    %508 = vmatpush1.bf16.xpose.msra.mxu0 0
    %509 = vmatprep.subr.bf16.mxu0 0
    %510 = vmatpush1.bf16.xpose.msra.mxu0 0
    %511 = vmatprep.subr.bf16.mxu0 0
    %512 = vmatpush1.bf16.xpose.msra.mxu0 0
    %513 = vmatprep.subr.bf16.mxu0 0
    %514 = vmatpush1.bf16.xpose.msra.mxu0 0
    %515 = vmatprep.subr.bf16.mxu0 0
    %516 = vmatpush1.bf16.xpose.msra.mxu0 0
    %517 = vmatprep.subr.bf16.mxu0 0
    %518 = vmatpush1.bf16.xpose.msra.mxu0 0
    %519 = vmatprep.subr.bf16.mxu0 0
    %520 = vmatpush1.bf16.xpose.msra.mxu0 0
    %521 = vmatprep.mubr.bf16.mxu0 0
    %522 = vmatmul.mubr.bf16.gmra.mrb[0].mxu0 %v484
    %v523 = vpop.f32.mrb[0].mxu0
    %v524 = vadd.f32 %v148, %v523
    %v525 = vpop.f32.mrb[0].mxu0
    %v526 = vpop.f32.mrb[0].mxu0
    %v527 = vpop.f32.mrb[0].mxu0
    %528 = vdwg.mxu0
    %v529 = vsel %vm255, %v474, -inf
    %530 = vmax.xlane.f32.xlu0 %v529
    %v531 = vpop.xlane.xlu0 %530
    %v532 = vsel %vm255, %v524, -inf
    %533 = vmax.xlane.f32.xlu0 %v532
    %v534 = vpop.xlane.xlu0 %533
    %v535 = vsub.f32 %v474, %v531
    %v536 = vsub.f32 %v524, %v534
    %v537 = vmul.f32 %v535, 1.442695
    %v538 = vpow.pop %v537
    %v539 = vmul.f32 %v536, 1.442695
    %v540 = vpow.pop %v539
    %v541 = vsel %vm255, %v538, 0.0
    %542 = vadd.xlane.f32.xlu0 %v541
    %v543 = vpop.xlane.xlu0 %542
    %v544 = vsel %vm255, %v540, 0.0
    %545 = vadd.xlane.f32.xlu0 %v544
    %v546 = vpop.xlane.xlu0 %545
    %v547 = vrcp.pop %v543
    %v548 = vrcp.pop %v546
    %v549 = vmul.f32 %v538, %v547
    %v550 = vmul.f32 %v540, %v548
    %v551 = vpack.c.bf16 %v549, %v549
    %v552 = vpack.c.bf16 %v550, %v550
    %553 = vrot.lane.b32.xlu0 %v135, 60
    %v554 = vpop.permute.xlu0 %553
    %v556 = vsel %vm255, %v551, 0
    %v559 = vsel %vm285, %v554, 0
    %561 = vmatprep.subr.bf16.mxu0 0
    %562 = vmatpush1.bf16.msra.mxu0 %v559
    %563 = vmatprep.subr.bf16.mxu0 0
    %564 = vmatpush1.bf16.msra.mxu0 0
    %565 = vmatprep.subr.bf16.mxu0 0
    %566 = vmatpush1.bf16.msra.mxu0 0
    %567 = vmatprep.subr.bf16.mxu0 0
    %568 = vmatpush1.bf16.msra.mxu0 0
    %569 = vmatprep.subr.bf16.mxu0 0
    %570 = vmatpush1.bf16.msra.mxu0 0
    %571 = vmatprep.subr.bf16.mxu0 0
    %572 = vmatpush1.bf16.msra.mxu0 0
    %573 = vmatprep.subr.bf16.mxu0 0
    %574 = vmatpush1.bf16.msra.mxu0 0
    %575 = vmatprep.subr.bf16.mxu0 0
    %576 = vmatpush1.bf16.msra.mxu0 0
    %577 = vmatprep.subr.bf16.mxu0 0
    %578 = vmatpush1.bf16.msra.mxu0 0
    %579 = vmatprep.subr.bf16.mxu0 0
    %580 = vmatpush1.bf16.msra.mxu0 0
    %581 = vmatprep.subr.bf16.mxu0 0
    %582 = vmatpush1.bf16.msra.mxu0 0
    %583 = vmatprep.subr.bf16.mxu0 0
    %584 = vmatpush1.bf16.msra.mxu0 0
    %585 = vmatprep.subr.bf16.mxu0 0
    %586 = vmatpush1.bf16.msra.mxu0 0
    %587 = vmatprep.subr.bf16.mxu0 0
    %588 = vmatpush1.bf16.msra.mxu0 0
    %589 = vmatprep.subr.bf16.mxu0 0
    %590 = vmatpush1.bf16.msra.mxu0 0
    %591 = vmatprep.subr.bf16.mxu0 0
    %592 = vmatpush1.bf16.msra.mxu0 0
    %593 = vmatprep.mubr.bf16.mxu0 0
    %594 = vmatmul.mubr.bf16.gmra.mrb[0].mxu0 %v556
    %v595 = vpop.f32.mrb[0].mxu0
    %v596 = vadd.f32 0.0, %v595
    %v597 = vpop.f32.mrb[0].mxu0
    %v598 = vpop.f32.mrb[0].mxu0
    %v599 = vpop.f32.mrb[0].mxu0
    %600 = vdwg.mxu0
    %601 = vrot.lane.b32.xlu0 %v136, 60
    %v602 = vpop.permute.xlu0 %601
    %v604 = vsel %vm255, %v552, 0
    %v607 = vsel %vm285, %v602, 0
    %609 = vmatprep.subr.bf16.mxu0 0
    %610 = vmatpush1.bf16.msra.mxu0 %v607
    %611 = vmatprep.subr.bf16.mxu0 0
    %612 = vmatpush1.bf16.msra.mxu0 0
    %613 = vmatprep.subr.bf16.mxu0 0
    %614 = vmatpush1.bf16.msra.mxu0 0
    %615 = vmatprep.subr.bf16.mxu0 0
    %616 = vmatpush1.bf16.msra.mxu0 0
    %617 = vmatprep.subr.bf16.mxu0 0
    %618 = vmatpush1.bf16.msra.mxu0 0
    %619 = vmatprep.subr.bf16.mxu0 0
    %620 = vmatpush1.bf16.msra.mxu0 0
    %621 = vmatprep.subr.bf16.mxu0 0
    %622 = vmatpush1.bf16.msra.mxu0 0
    %623 = vmatprep.subr.bf16.mxu0 0
    %624 = vmatpush1.bf16.msra.mxu0 0
    %625 = vmatprep.subr.bf16.mxu0 0
    %626 = vmatpush1.bf16.msra.mxu0 0
    %627 = vmatprep.subr.bf16.mxu0 0
    %628 = vmatpush1.bf16.msra.mxu0 0
    %629 = vmatprep.subr.bf16.mxu0 0
    %630 = vmatpush1.bf16.msra.mxu0 0
    %631 = vmatprep.subr.bf16.mxu0 0
    %632 = vmatpush1.bf16.msra.mxu0 0
    %633 = vmatprep.subr.bf16.mxu0 0
    %634 = vmatpush1.bf16.msra.mxu0 0
    %635 = vmatprep.subr.bf16.mxu0 0
    %636 = vmatpush1.bf16.msra.mxu0 0
    %637 = vmatprep.subr.bf16.mxu0 0
    %638 = vmatpush1.bf16.msra.mxu0 0
    %639 = vmatprep.subr.bf16.mxu0 0
    %640 = vmatpush1.bf16.msra.mxu0 0
    %641 = vmatprep.mubr.bf16.mxu0 0
    %642 = vmatmul.mubr.bf16.gmra.mrb[0].mxu0 %v604
    %v643 = vpop.f32.mrb[0].mxu0
    %v644 = vadd.f32 0.0, %v643
    %v645 = vpop.f32.mrb[0].mxu0
    %v646 = vpop.f32.mrb[0].mxu0
    %v647 = vpop.f32.mrb[0].mxu0
    %648 = vdwg.mxu0
    %v649 = vpack.c.bf16 %v644, %v596
    %s650 = scalar_lea.vmem [#allocation7], 2
    %v651 = vld [vmem:[%s650] sm:$0x3]
    %v653 = vsel %vm160, %v649, 0
    %v656 = vsel %vm382, %v651, 0
    %658 = vmatprep.subr.bf16.mxu0 0
    %659 = vmatpush1.bf16.msra.mxu0 %v656
    %660 = vmatprep.subr.bf16.mxu0 0
    %661 = vmatpush1.bf16.msra.mxu0 0
    %662 = vmatprep.subr.bf16.mxu0 0
    %663 = vmatpush1.bf16.msra.mxu0 0
    %664 = vmatprep.subr.bf16.mxu0 0
    %665 = vmatpush1.bf16.msra.mxu0 0
    %666 = vmatprep.subr.bf16.mxu0 0
    %667 = vmatpush1.bf16.msra.mxu0 0
    %668 = vmatprep.subr.bf16.mxu0 0
    %669 = vmatpush1.bf16.msra.mxu0 0
    %670 = vmatprep.subr.bf16.mxu0 0
    %671 = vmatpush1.bf16.msra.mxu0 0
    %672 = vmatprep.subr.bf16.mxu0 0
    %673 = vmatpush1.bf16.msra.mxu0 0
    %674 = vmatprep.subr.bf16.mxu0 0
    %675 = vmatpush1.bf16.msra.mxu0 0
    %676 = vmatprep.subr.bf16.mxu0 0
    %677 = vmatpush1.bf16.msra.mxu0 0
    %678 = vmatprep.subr.bf16.mxu0 0
    %679 = vmatpush1.bf16.msra.mxu0 0
    %680 = vmatprep.subr.bf16.mxu0 0
    %681 = vmatpush1.bf16.msra.mxu0 0
    %682 = vmatprep.subr.bf16.mxu0 0
    %683 = vmatpush1.bf16.msra.mxu0 0
    %684 = vmatprep.subr.bf16.mxu0 0
    %685 = vmatpush1.bf16.msra.mxu0 0
    %686 = vmatprep.subr.bf16.mxu0 0
    %687 = vmatpush1.bf16.msra.mxu0 0
    %688 = vmatprep.subr.bf16.mxu0 0
    %689 = vmatpush1.bf16.msra.mxu0 0
    %690 = vmatprep.mubr.bf16.mxu0 0
    %691 = vmatmul.mubr.bf16.gmra.mrb[0].mxu0 %v653
    %v692 = vpop.f32.mrb[0].mxu0
    %v693 = vadd.f32 0.0, %v692
    %v694 = vpop.f32.mrb[0].mxu0
    %v695 = vpop.f32.mrb[0].mxu0
    %v696 = vadd.f32 0.0, %v695
    %v697 = vpop.f32.mrb[0].mxu0
    %698 = vdwg.mxu0
    %v699 = vadd.f32 %v427, %v693
    %v700 = vadd.f32 %v428, %v696
    %701 = vrot.lane.b32.xlu0 %v135, 120
    %v702 = vpop.permute.xlu0 %701
    %703 = vrot.lane.b32.xlu0 %v135, 88
    %v704 = vpop.permute.xlu0 %703
    %v706 = vsel %vm160, %v702, 0
    %v709 = vsel %vm160, %v704, 0
    %711 = vmatprep.subr.bf16.mxu0 0
    %712 = vmatpush1.bf16.xpose.msra.mxu0 %v709
    %713 = vmatprep.subr.bf16.mxu0 0
    %714 = vmatpush1.bf16.xpose.msra.mxu0 0
    %715 = vmatprep.subr.bf16.mxu0 0
    %716 = vmatpush1.bf16.xpose.msra.mxu0 0
    %717 = vmatprep.subr.bf16.mxu0 0
    %718 = vmatpush1.bf16.xpose.msra.mxu0 0
    %719 = vmatprep.subr.bf16.mxu0 0
    %720 = vmatpush1.bf16.xpose.msra.mxu0 0
    %721 = vmatprep.subr.bf16.mxu0 0
    %722 = vmatpush1.bf16.xpose.msra.mxu0 0
    %723 = vmatprep.subr.bf16.mxu0 0
    %724 = vmatpush1.bf16.xpose.msra.mxu0 0
    %725 = vmatprep.subr.bf16.mxu0 0
    %726 = vmatpush1.bf16.xpose.msra.mxu0 0
    %727 = vmatprep.subr.bf16.mxu0 0
    %728 = vmatpush1.bf16.xpose.msra.mxu0 0
    %729 = vmatprep.subr.bf16.mxu0 0
    %730 = vmatpush1.bf16.xpose.msra.mxu0 0
    %731 = vmatprep.subr.bf16.mxu0 0
    %732 = vmatpush1.bf16.xpose.msra.mxu0 0
    %733 = vmatprep.subr.bf16.mxu0 0
    %734 = vmatpush1.bf16.xpose.msra.mxu0 0
    %735 = vmatprep.subr.bf16.mxu0 0
    %736 = vmatpush1.bf16.xpose.msra.mxu0 0
    %737 = vmatprep.subr.bf16.mxu0 0
    %738 = vmatpush1.bf16.xpose.msra.mxu0 0
    %739 = vmatprep.subr.bf16.mxu0 0
    %740 = vmatpush1.bf16.xpose.msra.mxu0 0
    %741 = vmatprep.subr.bf16.mxu0 0
    %742 = vmatpush1.bf16.xpose.msra.mxu0 0
    %743 = vmatprep.mubr.bf16.mxu0 0
    %744 = vmatmul.mubr.bf16.gmra.mrb[0].mxu0 %v706
    %v745 = vpop.f32.mrb[0].mxu0
    %v746 = vadd.f32 %v144, %v745
    %v747 = vpop.f32.mrb[0].mxu0
    %v748 = vpop.f32.mrb[0].mxu0
    %v749 = vpop.f32.mrb[0].mxu0
    %750 = vdwg.mxu0
    %751 = vrot.lane.b32.xlu0 %v136, 120
    %v752 = vpop.permute.xlu0 %751
    %753 = vrot.lane.b32.xlu0 %v136, 88
    %v754 = vpop.permute.xlu0 %753
    %v756 = vsel %vm160, %v752, 0
    %v759 = vsel %vm160, %v754, 0
    %761 = vmatprep.subr.bf16.mxu0 0
    %762 = vmatpush1.bf16.xpose.msra.mxu0 %v759
    %763 = vmatprep.subr.bf16.mxu0 0
    %764 = vmatpush1.bf16.xpose.msra.mxu0 0
    %765 = vmatprep.subr.bf16.mxu0 0
    %766 = vmatpush1.bf16.xpose.msra.mxu0 0
    %767 = vmatprep.subr.bf16.mxu0 0
    %768 = vmatpush1.bf16.xpose.msra.mxu0 0
    %769 = vmatprep.subr.bf16.mxu0 0
    %770 = vmatpush1.bf16.xpose.msra.mxu0 0
    %771 = vmatprep.subr.bf16.mxu0 0
    %772 = vmatpush1.bf16.xpose.msra.mxu0 0
    %773 = vmatprep.subr.bf16.mxu0 0
    %774 = vmatpush1.bf16.xpose.msra.mxu0 0
    %775 = vmatprep.subr.bf16.mxu0 0
    %776 = vmatpush1.bf16.xpose.msra.mxu0 0
    %777 = vmatprep.subr.bf16.mxu0 0
    %778 = vmatpush1.bf16.xpose.msra.mxu0 0
    %779 = vmatprep.subr.bf16.mxu0 0
    %780 = vmatpush1.bf16.xpose.msra.mxu0 0
    %781 = vmatprep.subr.bf16.mxu0 0
    %782 = vmatpush1.bf16.xpose.msra.mxu0 0
    %783 = vmatprep.subr.bf16.mxu0 0
    %784 = vmatpush1.bf16.xpose.msra.mxu0 0
    %785 = vmatprep.subr.bf16.mxu0 0
    %786 = vmatpush1.bf16.xpose.msra.mxu0 0
    %787 = vmatprep.subr.bf16.mxu0 0
    %788 = vmatpush1.bf16.xpose.msra.mxu0 0
    %789 = vmatprep.subr.bf16.mxu0 0
    %790 = vmatpush1.bf16.xpose.msra.mxu0 0
    %791 = vmatprep.subr.bf16.mxu0 0
    %792 = vmatpush1.bf16.xpose.msra.mxu0 0
    %793 = vmatprep.mubr.bf16.mxu0 0
    %794 = vmatmul.mubr.bf16.gmra.mrb[0].mxu0 %v756
    %v795 = vpop.f32.mrb[0].mxu0
    %v796 = vadd.f32 %v148, %v795
    %v797 = vpop.f32.mrb[0].mxu0
    %v798 = vpop.f32.mrb[0].mxu0
    %v799 = vpop.f32.mrb[0].mxu0
    %800 = vdwg.mxu0
    %v801 = vsel %vm255, %v746, -inf
    %802 = vmax.xlane.f32.xlu0 %v801
    %v803 = vpop.xlane.xlu0 %802
    %v804 = vsel %vm255, %v796, -inf
    %805 = vmax.xlane.f32.xlu0 %v804
    %v806 = vpop.xlane.xlu0 %805
    %v807 = vsub.f32 %v746, %v803
    %v808 = vsub.f32 %v796, %v806
    %v809 = vmul.f32 %v807, 1.442695
    %v810 = vpow.pop %v809
    %v811 = vmul.f32 %v808, 1.442695
    %v812 = vpow.pop %v811
    %v813 = vsel %vm255, %v810, 0.0
    %814 = vadd.xlane.f32.xlu0 %v813
    %v815 = vpop.xlane.xlu0 %814
    %v816 = vsel %vm255, %v812, 0.0
    %817 = vadd.xlane.f32.xlu0 %v816
    %v818 = vpop.xlane.xlu0 %817
    %v819 = vrcp.pop %v815
    %v820 = vrcp.pop %v818
    %v821 = vmul.f32 %v810, %v819
    %v822 = vmul.f32 %v812, %v820
    %v823 = vpack.c.bf16 %v821, %v821
    %v824 = vpack.c.bf16 %v822, %v822
    %825 = vrot.lane.b32.xlu0 %v135, 56
    %v826 = vpop.permute.xlu0 %825
    %v828 = vsel %vm255, %v823, 0
    %v831 = vsel %vm285, %v826, 0
    %833 = vmatprep.subr.bf16.mxu0 0
    %834 = vmatpush1.bf16.msra.mxu0 %v831
    %835 = vmatprep.subr.bf16.mxu0 0
    %836 = vmatpush1.bf16.msra.mxu0 0
    %837 = vmatprep.subr.bf16.mxu0 0
    %838 = vmatpush1.bf16.msra.mxu0 0
    %839 = vmatprep.subr.bf16.mxu0 0
    %840 = vmatpush1.bf16.msra.mxu0 0
    %841 = vmatprep.subr.bf16.mxu0 0
    %842 = vmatpush1.bf16.msra.mxu0 0
    %843 = vmatprep.subr.bf16.mxu0 0
    %844 = vmatpush1.bf16.msra.mxu0 0
    %845 = vmatprep.subr.bf16.mxu0 0
    %846 = vmatpush1.bf16.msra.mxu0 0
    %847 = vmatprep.subr.bf16.mxu0 0
    %848 = vmatpush1.bf16.msra.mxu0 0
    %849 = vmatprep.subr.bf16.mxu0 0
    %850 = vmatpush1.bf16.msra.mxu0 0
    %851 = vmatprep.subr.bf16.mxu0 0
    %852 = vmatpush1.bf16.msra.mxu0 0
    %853 = vmatprep.subr.bf16.mxu0 0
    %854 = vmatpush1.bf16.msra.mxu0 0
    %855 = vmatprep.subr.bf16.mxu0 0
    %856 = vmatpush1.bf16.msra.mxu0 0
    %857 = vmatprep.subr.bf16.mxu0 0
    %858 = vmatpush1.bf16.msra.mxu0 0
    %859 = vmatprep.subr.bf16.mxu0 0
    %860 = vmatpush1.bf16.msra.mxu0 0
    %861 = vmatprep.subr.bf16.mxu0 0
    %862 = vmatpush1.bf16.msra.mxu0 0
    %863 = vmatprep.subr.bf16.mxu0 0
    %864 = vmatpush1.bf16.msra.mxu0 0
    %865 = vmatprep.mubr.bf16.mxu0 0
    %866 = vmatmul.mubr.bf16.gmra.mrb[0].mxu0 %v828
    %v867 = vpop.f32.mrb[0].mxu0
    %v868 = vadd.f32 0.0, %v867
    %v869 = vpop.f32.mrb[0].mxu0
    %v870 = vpop.f32.mrb[0].mxu0
    %v871 = vpop.f32.mrb[0].mxu0
    %872 = vdwg.mxu0
    %873 = vrot.lane.b32.xlu0 %v136, 56
    %v874 = vpop.permute.xlu0 %873
    %v876 = vsel %vm255, %v824, 0
    %v879 = vsel %vm285, %v874, 0
    %881 = vmatprep.subr.bf16.mxu0 0
    %882 = vmatpush1.bf16.msra.mxu0 %v879
    %883 = vmatprep.subr.bf16.mxu0 0
    %884 = vmatpush1.bf16.msra.mxu0 0
    %885 = vmatprep.subr.bf16.mxu0 0
    %886 = vmatpush1.bf16.msra.mxu0 0
    %887 = vmatprep.subr.bf16.mxu0 0
    %888 = vmatpush1.bf16.msra.mxu0 0
    %889 = vmatprep.subr.bf16.mxu0 0
    %890 = vmatpush1.bf16.msra.mxu0 0
    %891 = vmatprep.subr.bf16.mxu0 0
    %892 = vmatpush1.bf16.msra.mxu0 0
    %893 = vmatprep.subr.bf16.mxu0 0
    %894 = vmatpush1.bf16.msra.mxu0 0
    %895 = vmatprep.subr.bf16.mxu0 0
    %896 = vmatpush1.bf16.msra.mxu0 0
    %897 = vmatprep.subr.bf16.mxu0 0
    %898 = vmatpush1.bf16.msra.mxu0 0
    %899 = vmatprep.subr.bf16.mxu0 0
    %900 = vmatpush1.bf16.msra.mxu0 0
    %901 = vmatprep.subr.bf16.mxu0 0
    %902 = vmatpush1.bf16.msra.mxu0 0
    %903 = vmatprep.subr.bf16.mxu0 0
    %904 = vmatpush1.bf16.msra.mxu0 0
    %905 = vmatprep.subr.bf16.mxu0 0
    %906 = vmatpush1.bf16.msra.mxu0 0
    %907 = vmatprep.subr.bf16.mxu0 0
    %908 = vmatpush1.bf16.msra.mxu0 0
    %909 = vmatprep.subr.bf16.mxu0 0
    %910 = vmatpush1.bf16.msra.mxu0 0
    %911 = vmatprep.subr.bf16.mxu0 0
    %912 = vmatpush1.bf16.msra.mxu0 0
    %913 = vmatprep.mubr.bf16.mxu0 0
    %914 = vmatmul.mubr.bf16.gmra.mrb[0].mxu0 %v876
    %v915 = vpop.f32.mrb[0].mxu0
    %v916 = vadd.f32 0.0, %v915
    %v917 = vpop.f32.mrb[0].mxu0
    %v918 = vpop.f32.mrb[0].mxu0
    %v919 = vpop.f32.mrb[0].mxu0
    %920 = vdwg.mxu0
    %v921 = vpack.c.bf16 %v916, %v868
    %s922 = scalar_lea.vmem [#allocation7], 4
    %v923 = vld [vmem:[%s922] sm:$0x3]
    %v925 = vsel %vm160, %v921, 0
    %v928 = vsel %vm382, %v923, 0
    %930 = vmatprep.subr.bf16.mxu0 0
    %931 = vmatpush1.bf16.msra.mxu0 %v928
    %932 = vmatprep.subr.bf16.mxu0 0
    %933 = vmatpush1.bf16.msra.mxu0 0
    %934 = vmatprep.subr.bf16.mxu0 0
    %935 = vmatpush1.bf16.msra.mxu0 0
    %936 = vmatprep.subr.bf16.mxu0 0
    %937 = vmatpush1.bf16.msra.mxu0 0
    %938 = vmatprep.subr.bf16.mxu0 0
    %939 = vmatpush1.bf16.msra.mxu0 0
    %940 = vmatprep.subr.bf16.mxu0 0
    %941 = vmatpush1.bf16.msra.mxu0 0
    %942 = vmatprep.subr.bf16.mxu0 0
    %943 = vmatpush1.bf16.msra.mxu0 0
    %944 = vmatprep.subr.bf16.mxu0 0
    %945 = vmatpush1.bf16.msra.mxu0 0
    %946 = vmatprep.subr.bf16.mxu0 0
    %947 = vmatpush1.bf16.msra.mxu0 0
    %948 = vmatprep.subr.bf16.mxu0 0
    %949 = vmatpush1.bf16.msra.mxu0 0
    %950 = vmatprep.subr.bf16.mxu0 0
    %951 = vmatpush1.bf16.msra.mxu0 0
    %952 = vmatprep.subr.bf16.mxu0 0
    %953 = vmatpush1.bf16.msra.mxu0 0
    %954 = vmatprep.subr.bf16.mxu0 0
    %955 = vmatpush1.bf16.msra.mxu0 0
    %956 = vmatprep.subr.bf16.mxu0 0
    %957 = vmatpush1.bf16.msra.mxu0 0
    %958 = vmatprep.subr.bf16.mxu0 0
    %959 = vmatpush1.bf16.msra.mxu0 0
    %960 = vmatprep.subr.bf16.mxu0 0
    %961 = vmatpush1.bf16.msra.mxu0 0
    %962 = vmatprep.mubr.bf16.mxu0 0
    %963 = vmatmul.mubr.bf16.gmra.mrb[0].mxu0 %v925
    %v964 = vpop.f32.mrb[0].mxu0
    %v965 = vadd.f32 0.0, %v964
    %v966 = vpop.f32.mrb[0].mxu0
    %v967 = vpop.f32.mrb[0].mxu0
    %v968 = vadd.f32 0.0, %v967
    %v969 = vpop.f32.mrb[0].mxu0
    %970 = vdwg.mxu0
    %v971 = vadd.f32 %v699, %v965
    %v972 = vadd.f32 %v700, %v968
    %973 = vrot.lane.b32.xlu0 %v135, 116
    %v974 = vpop.permute.xlu0 %973
    %975 = vrot.lane.b32.xlu0 %v135, 84
    %v976 = vpop.permute.xlu0 %975
    %v978 = vsel %vm160, %v974, 0
    %v981 = vsel %vm160, %v976, 0
    %983 = vmatprep.subr.bf16.mxu0 0
    %984 = vmatpush1.bf16.xpose.msra.mxu0 %v981
    %985 = vmatprep.subr.bf16.mxu0 0
    %986 = vmatpush1.bf16.xpose.msra.mxu0 0
    %987 = vmatprep.subr.bf16.mxu0 0
    %988 = vmatpush1.bf16.xpose.msra.mxu0 0
    %989 = vmatprep.subr.bf16.mxu0 0
    %990 = vmatpush1.bf16.xpose.msra.mxu0 0
    %991 = vmatprep.subr.bf16.mxu0 0
    %992 = vmatpush1.bf16.xpose.msra.mxu0 0
    %993 = vmatprep.subr.bf16.mxu0 0
    %994 = vmatpush1.bf16.xpose.msra.mxu0 0
    %995 = vmatprep.subr.bf16.mxu0 0
    %996 = vmatpush1.bf16.xpose.msra.mxu0 0
    %997 = vmatprep.subr.bf16.mxu0 0
    %998 = vmatpush1.bf16.xpose.msra.mxu0 0
    %999 = vmatprep.subr.bf16.mxu0 0
    %1000 = vmatpush1.bf16.xpose.msra.mxu0 0
    %1001 = vmatprep.subr.bf16.mxu0 0
    %1002 = vmatpush1.bf16.xpose.msra.mxu0 0
    %1003 = vmatprep.subr.bf16.mxu0 0
    %1004 = vmatpush1.bf16.xpose.msra.mxu0 0
    %1005 = vmatprep.subr.bf16.mxu0 0
    %1006 = vmatpush1.bf16.xpose.msra.mxu0 0
    %1007 = vmatprep.subr.bf16.mxu0 0
    %1008 = vmatpush1.bf16.xpose.msra.mxu0 0
    %1009 = vmatprep.subr.bf16.mxu0 0
    %1010 = vmatpush1.bf16.xpose.msra.mxu0 0
    %1011 = vmatprep.subr.bf16.mxu0 0
    %1012 = vmatpush1.bf16.xpose.msra.mxu0 0
    %1013 = vmatprep.subr.bf16.mxu0 0
    %1014 = vmatpush1.bf16.xpose.msra.mxu0 0
    %1015 = vmatprep.mubr.bf16.mxu0 0
    %1016 = vmatmul.mubr.bf16.gmra.mrb[0].mxu0 %v978
    %v1017 = vpop.f32.mrb[0].mxu0
    %v1018 = vadd.f32 %v144, %v1017
    %v1019 = vpop.f32.mrb[0].mxu0
    %v1020 = vpop.f32.mrb[0].mxu0
    %v1021 = vpop.f32.mrb[0].mxu0
    %1022 = vdwg.mxu0
    %1023 = vrot.lane.b32.xlu0 %v136, 116
    %v1024 = vpop.permute.xlu0 %1023
    %1025 = vrot.lane.b32.xlu0 %v136, 84
    %v1026 = vpop.permute.xlu0 %1025
    %v1028 = vsel %vm160, %v1024, 0
    %v1031 = vsel %vm160, %v1026, 0
    %1033 = vmatprep.subr.bf16.mxu0 0
    %1034 = vmatpush1.bf16.xpose.msra.mxu0 %v1031
    %1035 = vmatprep.subr.bf16.mxu0 0
    %1036 = vmatpush1.bf16.xpose.msra.mxu0 0
    %1037 = vmatprep.subr.bf16.mxu0 0
    %1038 = vmatpush1.bf16.xpose.msra.mxu0 0
    %1039 = vmatprep.subr.bf16.mxu0 0
    %1040 = vmatpush1.bf16.xpose.msra.mxu0 0
    %1041 = vmatprep.subr.bf16.mxu0 0
    %1042 = vmatpush1.bf16.xpose.msra.mxu0 0
    %1043 = vmatprep.subr.bf16.mxu0 0
    %1044 = vmatpush1.bf16.xpose.msra.mxu0 0
    %1045 = vmatprep.subr.bf16.mxu0 0
    %1046 = vmatpush1.bf16.xpose.msra.mxu0 0
    %1047 = vmatprep.subr.bf16.mxu0 0
    %1048 = vmatpush1.bf16.xpose.msra.mxu0 0
    %1049 = vmatprep.subr.bf16.mxu0 0
    %1050 = vmatpush1.bf16.xpose.msra.mxu0 0
    %1051 = vmatprep.subr.bf16.mxu0 0
    %1052 = vmatpush1.bf16.xpose.msra.mxu0 0
    %1053 = vmatprep.subr.bf16.mxu0 0
    %1054 = vmatpush1.bf16.xpose.msra.mxu0 0
    %1055 = vmatprep.subr.bf16.mxu0 0
    %1056 = vmatpush1.bf16.xpose.msra.mxu0 0
    %1057 = vmatprep.subr.bf16.mxu0 0
    %1058 = vmatpush1.bf16.xpose.msra.mxu0 0
    %1059 = vmatprep.subr.bf16.mxu0 0
    %1060 = vmatpush1.bf16.xpose.msra.mxu0 0
    %1061 = vmatprep.subr.bf16.mxu0 0
    %1062 = vmatpush1.bf16.xpose.msra.mxu0 0
    %1063 = vmatprep.subr.bf16.mxu0 0
    %1064 = vmatpush1.bf16.xpose.msra.mxu0 0
    %1065 = vmatprep.mubr.bf16.mxu0 0
    %1066 = vmatmul.mubr.bf16.gmra.mrb[0].mxu0 %v1028
    %v1067 = vpop.f32.mrb[0].mxu0
    %v1068 = vadd.f32 %v148, %v1067
    %v1069 = vpop.f32.mrb[0].mxu0
    %v1070 = vpop.f32.mrb[0].mxu0
    %v1071 = vpop.f32.mrb[0].mxu0
    %1072 = vdwg.mxu0
    %v1073 = vsel %vm255, %v1018, -inf
    %1074 = vmax.xlane.f32.xlu0 %v1073
    %v1075 = vpop.xlane.xlu0 %1074
    %v1076 = vsel %vm255, %v1068, -inf
    %1077 = vmax.xlane.f32.xlu0 %v1076
    %v1078 = vpop.xlane.xlu0 %1077
    %v1079 = vsub.f32 %v1018, %v1075
    %v1080 = vsub.f32 %v1068, %v1078
    %v1081 = vmul.f32 %v1079, 1.442695
    %v1082 = vpow.pop %v1081
    %v1083 = vmul.f32 %v1080, 1.442695
    %v1084 = vpow.pop %v1083
    %v1085 = vsel %vm255, %v1082, 0.0
    %1086 = vadd.xlane.f32.xlu0 %v1085
    %v1087 = vpop.xlane.xlu0 %1086
    %v1088 = vsel %vm255, %v1084, 0.0
    %1089 = vadd.xlane.f32.xlu0 %v1088
    %v1090 = vpop.xlane.xlu0 %1089
    %v1091 = vrcp.pop %v1087
    %v1092 = vrcp.pop %v1090
    %v1093 = vmul.f32 %v1082, %v1091
    %v1094 = vmul.f32 %v1084, %v1092
    %v1095 = vpack.c.bf16 %v1093, %v1093
    %v1096 = vpack.c.bf16 %v1094, %v1094
    %1097 = vrot.lane.b32.xlu0 %v135, 52
    %v1098 = vpop.permute.xlu0 %1097
    %v1100 = vsel %vm255, %v1095, 0
    %v1103 = vsel %vm285, %v1098, 0
    %1105 = vmatprep.subr.bf16.mxu0 0
    %1106 = vmatpush1.bf16.msra.mxu0 %v1103
    %1107 = vmatprep.subr.bf16.mxu0 0
    %1108 = vmatpush1.bf16.msra.mxu0 0
    %1109 = vmatprep.subr.bf16.mxu0 0
    %1110 = vmatpush1.bf16.msra.mxu0 0
    %1111 = vmatprep.subr.bf16.mxu0 0
    %1112 = vmatpush1.bf16.msra.mxu0 0
    %1113 = vmatprep.subr.bf16.mxu0 0
    %1114 = vmatpush1.bf16.msra.mxu0 0
    %1115 = vmatprep.subr.bf16.mxu0 0
    %1116 = vmatpush1.bf16.msra.mxu0 0
    %1117 = vmatprep.subr.bf16.mxu0 0
    %1118 = vmatpush1.bf16.msra.mxu0 0
    %1119 = vmatprep.subr.bf16.mxu0 0
    %1120 = vmatpush1.bf16.msra.mxu0 0
    %1121 = vmatprep.subr.bf16.mxu0 0
    %1122 = vmatpush1.bf16.msra.mxu0 0
    %1123 = vmatprep.subr.bf16.mxu0 0
    %1124 = vmatpush1.bf16.msra.mxu0 0
    %1125 = vmatprep.subr.bf16.mxu0 0
    %1126 = vmatpush1.bf16.msra.mxu0 0
    %1127 = vmatprep.subr.bf16.mxu0 0
    %1128 = vmatpush1.bf16.msra.mxu0 0
    %1129 = vmatprep.subr.bf16.mxu0 0
    %1130 = vmatpush1.bf16.msra.mxu0 0
    %1131 = vmatprep.subr.bf16.mxu0 0
    %1132 = vmatpush1.bf16.msra.mxu0 0
    %1133 = vmatprep.subr.bf16.mxu0 0
    %1134 = vmatpush1.bf16.msra.mxu0 0
    %1135 = vmatprep.subr.bf16.mxu0 0
    %1136 = vmatpush1.bf16.msra.mxu0 0
    %1137 = vmatprep.mubr.bf16.mxu0 0
    %1138 = vmatmul.mubr.bf16.gmra.mrb[0].mxu0 %v1100
    %v1139 = vpop.f32.mrb[0].mxu0
    %v1140 = vadd.f32 0.0, %v1139
    %v1141 = vpop.f32.mrb[0].mxu0
    %v1142 = vpop.f32.mrb[0].mxu0
    %v1143 = vpop.f32.mrb[0].mxu0
    %1144 = vdwg.mxu0
    %1145 = vrot.lane.b32.xlu0 %v136, 52
    %v1146 = vpop.permute.xlu0 %1145
    %v1148 = vsel %vm255, %v1096, 0
    %v1151 = vsel %vm285, %v1146, 0
    %1153 = vmatprep.subr.bf16.mxu0 0
    %1154 = vmatpush1.bf16.msra.mxu0 %v1151
    %1155 = vmatprep.subr.bf16.mxu0 0
    %1156 = vmatpush1.bf16.msra.mxu0 0
    %1157 = vmatprep.subr.bf16.mxu0 0
    %1158 = vmatpush1.bf16.msra.mxu0 0
    %1159 = vmatprep.subr.bf16.mxu0 0
    %1160 = vmatpush1.bf16.msra.mxu0 0
    %1161 = vmatprep.subr.bf16.mxu0 0
    %1162 = vmatpush1.bf16.msra.mxu0 0
    %1163 = vmatprep.subr.bf16.mxu0 0
    %1164 = vmatpush1.bf16.msra.mxu0 0
    %1165 = vmatprep.subr.bf16.mxu0 0
    %1166 = vmatpush1.bf16.msra.mxu0 0
    %1167 = vmatprep.subr.bf16.mxu0 0
    %1168 = vmatpush1.bf16.msra.mxu0 0
    %1169 = vmatprep.subr.bf16.mxu0 0
    %1170 = vmatpush1.bf16.msra.mxu0 0
    %1171 = vmatprep.subr.bf16.mxu0 0
    %1172 = vmatpush1.bf16.msra.mxu0 0
    %1173 = vmatprep.subr.bf16.mxu0 0
    %1174 = vmatpush1.bf16.msra.mxu0 0
    %1175 = vmatprep.subr.bf16.mxu0 0
    %1176 = vmatpush1.bf16.msra.mxu0 0
    %1177 = vmatprep.subr.bf16.mxu0 0
    %1178 = vmatpush1.bf16.msra.mxu0 0
    %1179 = vmatprep.subr.bf16.mxu0 0
    %1180 = vmatpush1.bf16.msra.mxu0 0
    %1181 = vmatprep.subr.bf16.mxu0 0
    %1182 = vmatpush1.bf16.msra.mxu0 0
    %1183 = vmatprep.subr.bf16.mxu0 0
    %1184 = vmatpush1.bf16.msra.mxu0 0
    %1185 = vmatprep.mubr.bf16.mxu0 0
    %1186 = vmatmul.mubr.bf16.gmra.mrb[0].mxu0 %v1148
    %v1187 = vpop.f32.mrb[0].mxu0
    %v1188 = vadd.f32 0.0, %v1187
    %v1189 = vpop.f32.mrb[0].mxu0
    %v1190 = vpop.f32.mrb[0].mxu0
    %v1191 = vpop.f32.mrb[0].mxu0
    %1192 = vdwg.mxu0
    %v1193 = vpack.c.bf16 %v1188, %v1140
    %s1194 = scalar_lea.vmem [#allocation7], 6
    %v1195 = vld [vmem:[%s1194] sm:$0x3]
    %v1197 = vsel %vm160, %v1193, 0
    %v1200 = vsel %vm382, %v1195, 0
    %1202 = vmatprep.subr.bf16.mxu0 0
    %1203 = vmatpush1.bf16.msra.mxu0 %v1200
    %1204 = vmatprep.subr.bf16.mxu0 0
    %1205 = vmatpush1.bf16.msra.mxu0 0
    %1206 = vmatprep.subr.bf16.mxu0 0
    %1207 = vmatpush1.bf16.msra.mxu0 0
    %1208 = vmatprep.subr.bf16.mxu0 0
    %1209 = vmatpush1.bf16.msra.mxu0 0
    %1210 = vmatprep.subr.bf16.mxu0 0
    %1211 = vmatpush1.bf16.msra.mxu0 0
    %1212 = vmatprep.subr.bf16.mxu0 0
    %1213 = vmatpush1.bf16.msra.mxu0 0
    %1214 = vmatprep.subr.bf16.mxu0 0
    %1215 = vmatpush1.bf16.msra.mxu0 0
    %1216 = vmatprep.subr.bf16.mxu0 0
    %1217 = vmatpush1.bf16.msra.mxu0 0
    %1218 = vmatprep.subr.bf16.mxu0 0
    %1219 = vmatpush1.bf16.msra.mxu0 0
    %1220 = vmatprep.subr.bf16.mxu0 0
    %1221 = vmatpush1.bf16.msra.mxu0 0
    %1222 = vmatprep.subr.bf16.mxu0 0
    %1223 = vmatpush1.bf16.msra.mxu0 0
    %1224 = vmatprep.subr.bf16.mxu0 0
    %1225 = vmatpush1.bf16.msra.mxu0 0
    %1226 = vmatprep.subr.bf16.mxu0 0
    %1227 = vmatpush1.bf16.msra.mxu0 0
    %1228 = vmatprep.subr.bf16.mxu0 0
    %1229 = vmatpush1.bf16.msra.mxu0 0
    %1230 = vmatprep.subr.bf16.mxu0 0
    %1231 = vmatpush1.bf16.msra.mxu0 0
    %1232 = vmatprep.subr.bf16.mxu0 0
    %1233 = vmatpush1.bf16.msra.mxu0 0
    %1234 = vmatprep.mubr.bf16.mxu0 0
    %1235 = vmatmul.mubr.bf16.gmra.mrb[0].mxu0 %v1197
    %v1236 = vpop.f32.mrb[0].mxu0
    %v1237 = vadd.f32 0.0, %v1236
    %v1238 = vpop.f32.mrb[0].mxu0
    %v1239 = vpop.f32.mrb[0].mxu0
    %v1240 = vadd.f32 0.0, %v1239
    %v1241 = vpop.f32.mrb[0].mxu0
    %1242 = vdwg.mxu0
    %v1243 = vadd.f32 %v971, %v1237
    %v1244 = vadd.f32 %v972, %v1240
    %1245 = vrot.lane.b32.xlu0 %v135, 112
    %v1246 = vpop.permute.xlu0 %1245
    %1247 = vrot.lane.b32.xlu0 %v135, 80
    %v1248 = vpop.permute.xlu0 %1247
    %v1250 = vsel %vm160, %v1246, 0
    %v1253 = vsel %vm160, %v1248, 0
    %1255 = vmatprep.subr.bf16.mxu0 0
    %1256 = vmatpush1.bf16.xpose.msra.mxu0 %v1253
    %1257 = vmatprep.subr.bf16.mxu0 0
    %1258 = vmatpush1.bf16.xpose.msra.mxu0 0
    %1259 = vmatprep.subr.bf16.mxu0 0
    %1260 = vmatpush1.bf16.xpose.msra.mxu0 0
    %1261 = vmatprep.subr.bf16.mxu0 0
    %1262 = vmatpush1.bf16.xpose.msra.mxu0 0
    %1263 = vmatprep.subr.bf16.mxu0 0
    %1264 = vmatpush1.bf16.xpose.msra.mxu0 0
    %1265 = vmatprep.subr.bf16.mxu0 0
    %1266 = vmatpush1.bf16.xpose.msra.mxu0 0
    %1267 = vmatprep.subr.bf16.mxu0 0
    %1268 = vmatpush1.bf16.xpose.msra.mxu0 0
    %1269 = vmatprep.subr.bf16.mxu0 0
    %1270 = vmatpush1.bf16.xpose.msra.mxu0 0
    %1271 = vmatprep.subr.bf16.mxu0 0
    %1272 = vmatpush1.bf16.xpose.msra.mxu0 0
    %1273 = vmatprep.subr.bf16.mxu0 0
    %1274 = vmatpush1.bf16.xpose.msra.mxu0 0
    %1275 = vmatprep.subr.bf16.mxu0 0
    %1276 = vmatpush1.bf16.xpose.msra.mxu0 0
    %1277 = vmatprep.subr.bf16.mxu0 0
    %1278 = vmatpush1.bf16.xpose.msra.mxu0 0
    %1279 = vmatprep.subr.bf16.mxu0 0
    %1280 = vmatpush1.bf16.xpose.msra.mxu0 0
    %1281 = vmatprep.subr.bf16.mxu0 0
    %1282 = vmatpush1.bf16.xpose.msra.mxu0 0
    %1283 = vmatprep.subr.bf16.mxu0 0
    %1284 = vmatpush1.bf16.xpose.msra.mxu0 0
    %1285 = vmatprep.subr.bf16.mxu0 0
    %1286 = vmatpush1.bf16.xpose.msra.mxu0 0
    %1287 = vmatprep.mubr.bf16.mxu0 0
    %1288 = vmatmul.mubr.bf16.gmra.mrb[0].mxu0 %v1250
    %v1289 = vpop.f32.mrb[0].mxu0
    %v1290 = vadd.f32 %v144, %v1289
    %v1291 = vpop.f32.mrb[0].mxu0
    %v1292 = vpop.f32.mrb[0].mxu0
    %v1293 = vpop.f32.mrb[0].mxu0
    %1294 = vdwg.mxu0
    %1295 = vrot.lane.b32.xlu0 %v136, 112
    %v1296 = vpop.permute.xlu0 %1295
    %1297 = vrot.lane.b32.xlu0 %v136, 80
    %v1298 = vpop.permute.xlu0 %1297
    %v1300 = vsel %vm160, %v1296, 0
    %v1303 = vsel %vm160, %v1298, 0
    %1305 = vmatprep.subr.bf16.mxu0 0
    %1306 = vmatpush1.bf16.xpose.msra.mxu0 %v1303
    %1307 = vmatprep.subr.bf16.mxu0 0
    %1308 = vmatpush1.bf16.xpose.msra.mxu0 0
    %1309 = vmatprep.subr.bf16.mxu0 0
    %1310 = vmatpush1.bf16.xpose.msra.mxu0 0
    %1311 = vmatprep.subr.bf16.mxu0 0
    %1312 = vmatpush1.bf16.xpose.msra.mxu0 0
    %1313 = vmatprep.subr.bf16.mxu0 0
    %1314 = vmatpush1.bf16.xpose.msra.mxu0 0
    %1315 = vmatprep.subr.bf16.mxu0 0
    %1316 = vmatpush1.bf16.xpose.msra.mxu0 0
    %1317 = vmatprep.subr.bf16.mxu0 0
    %1318 = vmatpush1.bf16.xpose.msra.mxu0 0
    %1319 = vmatprep.subr.bf16.mxu0 0
    %1320 = vmatpush1.bf16.xpose.msra.mxu0 0
    %1321 = vmatprep.subr.bf16.mxu0 0
    %1322 = vmatpush1.bf16.xpose.msra.mxu0 0
    %1323 = vmatprep.subr.bf16.mxu0 0
    %1324 = vmatpush1.bf16.xpose.msra.mxu0 0
    %1325 = vmatprep.subr.bf16.mxu0 0
    %1326 = vmatpush1.bf16.xpose.msra.mxu0 0
    %1327 = vmatprep.subr.bf16.mxu0 0
    %1328 = vmatpush1.bf16.xpose.msra.mxu0 0
    %1329 = vmatprep.subr.bf16.mxu0 0
    %1330 = vmatpush1.bf16.xpose.msra.mxu0 0
    %1331 = vmatprep.subr.bf16.mxu0 0
    %1332 = vmatpush1.bf16.xpose.msra.mxu0 0
    %1333 = vmatprep.subr.bf16.mxu0 0
    %1334 = vmatpush1.bf16.xpose.msra.mxu0 0
    %1335 = vmatprep.subr.bf16.mxu0 0
    %1336 = vmatpush1.bf16.xpose.msra.mxu0 0
    %1337 = vmatprep.mubr.bf16.mxu0 0
    %1338 = vmatmul.mubr.bf16.gmra.mrb[0].mxu0 %v1300
    %v1339 = vpop.f32.mrb[0].mxu0
    %v1340 = vadd.f32 %v148, %v1339
    %v1341 = vpop.f32.mrb[0].mxu0
    %v1342 = vpop.f32.mrb[0].mxu0
    %v1343 = vpop.f32.mrb[0].mxu0
    %1344 = vdwg.mxu0
    %v1345 = vsel %vm255, %v1290, -inf
    %1346 = vmax.xlane.f32.xlu0 %v1345
    %v1347 = vpop.xlane.xlu0 %1346
    %v1348 = vsel %vm255, %v1340, -inf
    %1349 = vmax.xlane.f32.xlu0 %v1348
    %v1350 = vpop.xlane.xlu0 %1349
    %v1351 = vsub.f32 %v1290, %v1347
    %v1352 = vsub.f32 %v1340, %v1350
    %v1353 = vmul.f32 %v1351, 1.442695
    %v1354 = vpow.pop %v1353
    %v1355 = vmul.f32 %v1352, 1.442695
    %v1356 = vpow.pop %v1355
    %v1357 = vsel %vm255, %v1354, 0.0
    %1358 = vadd.xlane.f32.xlu0 %v1357
    %v1359 = vpop.xlane.xlu0 %1358
    %v1360 = vsel %vm255, %v1356, 0.0
    %1361 = vadd.xlane.f32.xlu0 %v1360
    %v1362 = vpop.xlane.xlu0 %1361
    %v1363 = vrcp.pop %v1359
    %v1364 = vrcp.pop %v1362
    %v1365 = vmul.f32 %v1354, %v1363
    %v1366 = vmul.f32 %v1356, %v1364
    %v1367 = vpack.c.bf16 %v1365, %v1365
    %v1368 = vpack.c.bf16 %v1366, %v1366
    %1369 = vrot.lane.b32.xlu0 %v135, 48
    %v1370 = vpop.permute.xlu0 %1369
    %v1372 = vsel %vm255, %v1367, 0
    %v1375 = vsel %vm285, %v1370, 0
    %1377 = vmatprep.subr.bf16.mxu0 0
    %1378 = vmatpush1.bf16.msra.mxu0 %v1375
    %1379 = vmatprep.subr.bf16.mxu0 0
    %1380 = vmatpush1.bf16.msra.mxu0 0
    %1381 = vmatprep.subr.bf16.mxu0 0
    %1382 = vmatpush1.bf16.msra.mxu0 0
    %1383 = vmatprep.subr.bf16.mxu0 0
    %1384 = vmatpush1.bf16.msra.mxu0 0
    %1385 = vmatprep.subr.bf16.mxu0 0
    %1386 = vmatpush1.bf16.msra.mxu0 0
    %1387 = vmatprep.subr.bf16.mxu0 0
    %1388 = vmatpush1.bf16.msra.mxu0 0
    %1389 = vmatprep.subr.bf16.mxu0 0
    %1390 = vmatpush1.bf16.msra.mxu0 0
    %1391 = vmatprep.subr.bf16.mxu0 0
    %1392 = vmatpush1.bf16.msra.mxu0 0
    %1393 = vmatprep.subr.bf16.mxu0 0
    %1394 = vmatpush1.bf16.msra.mxu0 0
    %1395 = vmatprep.subr.bf16.mxu0 0
    %1396 = vmatpush1.bf16.msra.mxu0 0
    %1397 = vmatprep.subr.bf16.mxu0 0
    %1398 = vmatpush1.bf16.msra.mxu0 0
    %1399 = vmatprep.subr.bf16.mxu0 0
    %1400 = vmatpush1.bf16.msra.mxu0 0
    %1401 = vmatprep.subr.bf16.mxu0 0
    %1402 = vmatpush1.bf16.msra.mxu0 0
    %1403 = vmatprep.subr.bf16.mxu0 0
    %1404 = vmatpush1.bf16.msra.mxu0 0
    %1405 = vmatprep.subr.bf16.mxu0 0
    %1406 = vmatpush1.bf16.msra.mxu0 0
    %1407 = vmatprep.subr.bf16.mxu0 0
    %1408 = vmatpush1.bf16.msra.mxu0 0
    %1409 = vmatprep.mubr.bf16.mxu0 0
    %1410 = vmatmul.mubr.bf16.gmra.mrb[0].mxu0 %v1372
    %v1411 = vpop.f32.mrb[0].mxu0
    %v1412 = vadd.f32 0.0, %v1411
    %v1413 = vpop.f32.mrb[0].mxu0
    %v1414 = vpop.f32.mrb[0].mxu0
    %v1415 = vpop.f32.mrb[0].mxu0
    %1416 = vdwg.mxu0
    %1417 = vrot.lane.b32.xlu0 %v136, 48
    %v1418 = vpop.permute.xlu0 %1417
    %v1420 = vsel %vm255, %v1368, 0
    %v1423 = vsel %vm285, %v1418, 0
    %1425 = vmatprep.subr.bf16.mxu0 0
    %1426 = vmatpush1.bf16.msra.mxu0 %v1423
    %1427 = vmatprep.subr.bf16.mxu0 0
    %1428 = vmatpush1.bf16.msra.mxu0 0
    %1429 = vmatprep.subr.bf16.mxu0 0
    %1430 = vmatpush1.bf16.msra.mxu0 0
    %1431 = vmatprep.subr.bf16.mxu0 0
    %1432 = vmatpush1.bf16.msra.mxu0 0
    %1433 = vmatprep.subr.bf16.mxu0 0
    %1434 = vmatpush1.bf16.msra.mxu0 0
    %1435 = vmatprep.subr.bf16.mxu0 0
    %1436 = vmatpush1.bf16.msra.mxu0 0
    %1437 = vmatprep.subr.bf16.mxu0 0
    %1438 = vmatpush1.bf16.msra.mxu0 0
    %1439 = vmatprep.subr.bf16.mxu0 0
    %1440 = vmatpush1.bf16.msra.mxu0 0
    %1441 = vmatprep.subr.bf16.mxu0 0
    %1442 = vmatpush1.bf16.msra.mxu0 0
    %1443 = vmatprep.subr.bf16.mxu0 0
    %1444 = vmatpush1.bf16.msra.mxu0 0
    %1445 = vmatprep.subr.bf16.mxu0 0
    %1446 = vmatpush1.bf16.msra.mxu0 0
    %1447 = vmatprep.subr.bf16.mxu0 0
    %1448 = vmatpush1.bf16.msra.mxu0 0
    %1449 = vmatprep.subr.bf16.mxu0 0
    %1450 = vmatpush1.bf16.msra.mxu0 0
    %1451 = vmatprep.subr.bf16.mxu0 0
    %1452 = vmatpush1.bf16.msra.mxu0 0
    %1453 = vmatprep.subr.bf16.mxu0 0
    %1454 = vmatpush1.bf16.msra.mxu0 0
    %1455 = vmatprep.subr.bf16.mxu0 0
    %1456 = vmatpush1.bf16.msra.mxu0 0
    %1457 = vmatprep.mubr.bf16.mxu0 0
    %1458 = vmatmul.mubr.bf16.gmra.mrb[0].mxu0 %v1420
    %v1459 = vpop.f32.mrb[0].mxu0
    %v1460 = vadd.f32 0.0, %v1459
    %v1461 = vpop.f32.mrb[0].mxu0
    %v1462 = vpop.f32.mrb[0].mxu0
    %v1463 = vpop.f32.mrb[0].mxu0
    %1464 = vdwg.mxu0
    %v1465 = vpack.c.bf16 %v1460, %v1412
    %s1466 = scalar_lea.vmem [#allocation7], 8
    %v1467 = vld [vmem:[%s1466] sm:$0x3]
    %v1469 = vsel %vm160, %v1465, 0
    %v1472 = vsel %vm382, %v1467, 0
    %1474 = vmatprep.subr.bf16.mxu0 0
    %1475 = vmatpush1.bf16.msra.mxu0 %v1472
    %1476 = vmatprep.subr.bf16.mxu0 0
    %1477 = vmatpush1.bf16.msra.mxu0 0
    %1478 = vmatprep.subr.bf16.mxu0 0
    %1479 = vmatpush1.bf16.msra.mxu0 0
    %1480 = vmatprep.subr.bf16.mxu0 0
    %1481 = vmatpush1.bf16.msra.mxu0 0
    %1482 = vmatprep.subr.bf16.mxu0 0
    %1483 = vmatpush1.bf16.msra.mxu0 0
    %1484 = vmatprep.subr.bf16.mxu0 0
    %1485 = vmatpush1.bf16.msra.mxu0 0
    %1486 = vmatprep.subr.bf16.mxu0 0
    %1487 = vmatpush1.bf16.msra.mxu0 0
    %1488 = vmatprep.subr.bf16.mxu0 0
    %1489 = vmatpush1.bf16.msra.mxu0 0
    %1490 = vmatprep.subr.bf16.mxu0 0
    %1491 = vmatpush1.bf16.msra.mxu0 0
    %1492 = vmatprep.subr.bf16.mxu0 0
    %1493 = vmatpush1.bf16.msra.mxu0 0
    %1494 = vmatprep.subr.bf16.mxu0 0
    %1495 = vmatpush1.bf16.msra.mxu0 0
    %1496 = vmatprep.subr.bf16.mxu0 0
    %1497 = vmatpush1.bf16.msra.mxu0 0
    %1498 = vmatprep.subr.bf16.mxu0 0
    %1499 = vmatpush1.bf16.msra.mxu0 0
    %1500 = vmatprep.subr.bf16.mxu0 0
    %1501 = vmatpush1.bf16.msra.mxu0 0
    %1502 = vmatprep.subr.bf16.mxu0 0
    %1503 = vmatpush1.bf16.msra.mxu0 0
    %1504 = vmatprep.subr.bf16.mxu0 0
    %1505 = vmatpush1.bf16.msra.mxu0 0
    %1506 = vmatprep.mubr.bf16.mxu0 0
    %1507 = vmatmul.mubr.bf16.gmra.mrb[0].mxu0 %v1469
    %v1508 = vpop.f32.mrb[0].mxu0
    %v1509 = vadd.f32 0.0, %v1508
    %v1510 = vpop.f32.mrb[0].mxu0
    %v1511 = vpop.f32.mrb[0].mxu0
    %v1512 = vadd.f32 0.0, %v1511
    %v1513 = vpop.f32.mrb[0].mxu0
    %1514 = vdwg.mxu0
    %v1515 = vadd.f32 %v1243, %v1509
    %v1516 = vadd.f32 %v1244, %v1512
    %1517 = vrot.lane.b32.xlu0 %v135, 108
    %v1518 = vpop.permute.xlu0 %1517
    %1519 = vrot.lane.b32.xlu0 %v135, 76
    %v1520 = vpop.permute.xlu0 %1519
    %v1522 = vsel %vm160, %v1518, 0
    %v1525 = vsel %vm160, %v1520, 0
    %1527 = vmatprep.subr.bf16.mxu0 0
    %1528 = vmatpush1.bf16.xpose.msra.mxu0 %v1525
    %1529 = vmatprep.subr.bf16.mxu0 0
    %1530 = vmatpush1.bf16.xpose.msra.mxu0 0
    %1531 = vmatprep.subr.bf16.mxu0 0
    %1532 = vmatpush1.bf16.xpose.msra.mxu0 0
    %1533 = vmatprep.subr.bf16.mxu0 0
    %1534 = vmatpush1.bf16.xpose.msra.mxu0 0
    %1535 = vmatprep.subr.bf16.mxu0 0
    %1536 = vmatpush1.bf16.xpose.msra.mxu0 0
    %1537 = vmatprep.subr.bf16.mxu0 0
    %1538 = vmatpush1.bf16.xpose.msra.mxu0 0
    %1539 = vmatprep.subr.bf16.mxu0 0
    %1540 = vmatpush1.bf16.xpose.msra.mxu0 0
    %1541 = vmatprep.subr.bf16.mxu0 0
    %1542 = vmatpush1.bf16.xpose.msra.mxu0 0
    %1543 = vmatprep.subr.bf16.mxu0 0
    %1544 = vmatpush1.bf16.xpose.msra.mxu0 0
    %1545 = vmatprep.subr.bf16.mxu0 0
    %1546 = vmatpush1.bf16.xpose.msra.mxu0 0
    %1547 = vmatprep.subr.bf16.mxu0 0
    %1548 = vmatpush1.bf16.xpose.msra.mxu0 0
    %1549 = vmatprep.subr.bf16.mxu0 0
    %1550 = vmatpush1.bf16.xpose.msra.mxu0 0
    %1551 = vmatprep.subr.bf16.mxu0 0
    %1552 = vmatpush1.bf16.xpose.msra.mxu0 0
    %1553 = vmatprep.subr.bf16.mxu0 0
    %1554 = vmatpush1.bf16.xpose.msra.mxu0 0
    %1555 = vmatprep.subr.bf16.mxu0 0
    %1556 = vmatpush1.bf16.xpose.msra.mxu0 0
    %1557 = vmatprep.subr.bf16.mxu0 0
    %1558 = vmatpush1.bf16.xpose.msra.mxu0 0
    %1559 = vmatprep.mubr.bf16.mxu0 0
    %1560 = vmatmul.mubr.bf16.gmra.mrb[0].mxu0 %v1522
    %v1561 = vpop.f32.mrb[0].mxu0
    %v1562 = vadd.f32 %v144, %v1561
    %v1563 = vpop.f32.mrb[0].mxu0
    %v1564 = vpop.f32.mrb[0].mxu0
    %v1565 = vpop.f32.mrb[0].mxu0
    %1566 = vdwg.mxu0
    %1567 = vrot.lane.b32.xlu0 %v136, 108
    %v1568 = vpop.permute.xlu0 %1567
    %1569 = vrot.lane.b32.xlu0 %v136, 76
    %v1570 = vpop.permute.xlu0 %1569
    %v1572 = vsel %vm160, %v1568, 0
    %v1575 = vsel %vm160, %v1570, 0
    %1577 = vmatprep.subr.bf16.mxu0 0
    %1578 = vmatpush1.bf16.xpose.msra.mxu0 %v1575
    %1579 = vmatprep.subr.bf16.mxu0 0
    %1580 = vmatpush1.bf16.xpose.msra.mxu0 0
    %1581 = vmatprep.subr.bf16.mxu0 0
    %1582 = vmatpush1.bf16.xpose.msra.mxu0 0
    %1583 = vmatprep.subr.bf16.mxu0 0
    %1584 = vmatpush1.bf16.xpose.msra.mxu0 0
    %1585 = vmatprep.subr.bf16.mxu0 0
    %1586 = vmatpush1.bf16.xpose.msra.mxu0 0
    %1587 = vmatprep.subr.bf16.mxu0 0
    %1588 = vmatpush1.bf16.xpose.msra.mxu0 0
    %1589 = vmatprep.subr.bf16.mxu0 0
    %1590 = vmatpush1.bf16.xpose.msra.mxu0 0
    %1591 = vmatprep.subr.bf16.mxu0 0
    %1592 = vmatpush1.bf16.xpose.msra.mxu0 0
    %1593 = vmatprep.subr.bf16.mxu0 0
    %1594 = vmatpush1.bf16.xpose.msra.mxu0 0
    %1595 = vmatprep.subr.bf16.mxu0 0
    %1596 = vmatpush1.bf16.xpose.msra.mxu0 0
    %1597 = vmatprep.subr.bf16.mxu0 0
    %1598 = vmatpush1.bf16.xpose.msra.mxu0 0
    %1599 = vmatprep.subr.bf16.mxu0 0
    %1600 = vmatpush1.bf16.xpose.msra.mxu0 0
    %1601 = vmatprep.subr.bf16.mxu0 0
    %1602 = vmatpush1.bf16.xpose.msra.mxu0 0
    %1603 = vmatprep.subr.bf16.mxu0 0
    %1604 = vmatpush1.bf16.xpose.msra.mxu0 0
    %1605 = vmatprep.subr.bf16.mxu0 0
    %1606 = vmatpush1.bf16.xpose.msra.mxu0 0
    %1607 = vmatprep.subr.bf16.mxu0 0
    %1608 = vmatpush1.bf16.xpose.msra.mxu0 0
    %1609 = vmatprep.mubr.bf16.mxu0 0
    %1610 = vmatmul.mubr.bf16.gmra.mrb[0].mxu0 %v1572
    %v1611 = vpop.f32.mrb[0].mxu0
    %v1612 = vadd.f32 %v148, %v1611
    %v1613 = vpop.f32.mrb[0].mxu0
    %v1614 = vpop.f32.mrb[0].mxu0
    %v1615 = vpop.f32.mrb[0].mxu0
    %1616 = vdwg.mxu0
    %v1617 = vsel %vm255, %v1562, -inf
    %1618 = vmax.xlane.f32.xlu0 %v1617
    %v1619 = vpop.xlane.xlu0 %1618
    %v1620 = vsel %vm255, %v1612, -inf
    %1621 = vmax.xlane.f32.xlu0 %v1620
    %v1622 = vpop.xlane.xlu0 %1621
    %v1623 = vsub.f32 %v1562, %v1619
    %v1624 = vsub.f32 %v1612, %v1622
    %v1625 = vmul.f32 %v1623, 1.442695
    %v1626 = vpow.pop %v1625
    %v1627 = vmul.f32 %v1624, 1.442695
    %v1628 = vpow.pop %v1627
    %v1629 = vsel %vm255, %v1626, 0.0
    %1630 = vadd.xlane.f32.xlu0 %v1629
    %v1631 = vpop.xlane.xlu0 %1630
    %v1632 = vsel %vm255, %v1628, 0.0
    %1633 = vadd.xlane.f32.xlu0 %v1632
    %v1634 = vpop.xlane.xlu0 %1633
    %v1635 = vrcp.pop %v1631
    %v1636 = vrcp.pop %v1634
    %v1637 = vmul.f32 %v1626, %v1635
    %v1638 = vmul.f32 %v1628, %v1636
    %v1639 = vpack.c.bf16 %v1637, %v1637
    %v1640 = vpack.c.bf16 %v1638, %v1638
    %1641 = vrot.lane.b32.xlu0 %v135, 44
    %v1642 = vpop.permute.xlu0 %1641
    %v1644 = vsel %vm255, %v1639, 0
    %v1647 = vsel %vm285, %v1642, 0
    %1649 = vmatprep.subr.bf16.mxu0 0
    %1650 = vmatpush1.bf16.msra.mxu0 %v1647
    %1651 = vmatprep.subr.bf16.mxu0 0
    %1652 = vmatpush1.bf16.msra.mxu0 0
    %1653 = vmatprep.subr.bf16.mxu0 0
    %1654 = vmatpush1.bf16.msra.mxu0 0
    %1655 = vmatprep.subr.bf16.mxu0 0
    %1656 = vmatpush1.bf16.msra.mxu0 0
    %1657 = vmatprep.subr.bf16.mxu0 0
    %1658 = vmatpush1.bf16.msra.mxu0 0
    %1659 = vmatprep.subr.bf16.mxu0 0
    %1660 = vmatpush1.bf16.msra.mxu0 0
    %1661 = vmatprep.subr.bf16.mxu0 0
    %1662 = vmatpush1.bf16.msra.mxu0 0
    %1663 = vmatprep.subr.bf16.mxu0 0
    %1664 = vmatpush1.bf16.msra.mxu0 0
    %1665 = vmatprep.subr.bf16.mxu0 0
    %1666 = vmatpush1.bf16.msra.mxu0 0
    %1667 = vmatprep.subr.bf16.mxu0 0
    %1668 = vmatpush1.bf16.msra.mxu0 0
    %1669 = vmatprep.subr.bf16.mxu0 0
    %1670 = vmatpush1.bf16.msra.mxu0 0
    %1671 = vmatprep.subr.bf16.mxu0 0
    %1672 = vmatpush1.bf16.msra.mxu0 0
    %1673 = vmatprep.subr.bf16.mxu0 0
    %1674 = vmatpush1.bf16.msra.mxu0 0
    %1675 = vmatprep.subr.bf16.mxu0 0
    %1676 = vmatpush1.bf16.msra.mxu0 0
    %1677 = vmatprep.subr.bf16.mxu0 0
    %1678 = vmatpush1.bf16.msra.mxu0 0
    %1679 = vmatprep.subr.bf16.mxu0 0
    %1680 = vmatpush1.bf16.msra.mxu0 0
    %1681 = vmatprep.mubr.bf16.mxu0 0
    %1682 = vmatmul.mubr.bf16.gmra.mrb[0].mxu0 %v1644
    %v1683 = vpop.f32.mrb[0].mxu0
    %v1684 = vadd.f32 0.0, %v1683
    %v1685 = vpop.f32.mrb[0].mxu0
    %v1686 = vpop.f32.mrb[0].mxu0
    %v1687 = vpop.f32.mrb[0].mxu0
    %1688 = vdwg.mxu0
    %1689 = vrot.lane.b32.xlu0 %v136, 44
    %v1690 = vpop.permute.xlu0 %1689
    %v1692 = vsel %vm255, %v1640, 0
    %v1695 = vsel %vm285, %v1690, 0
    %1697 = vmatprep.subr.bf16.mxu0 0
    %1698 = vmatpush1.bf16.msra.mxu0 %v1695
    %1699 = vmatprep.subr.bf16.mxu0 0
    %1700 = vmatpush1.bf16.msra.mxu0 0
    %1701 = vmatprep.subr.bf16.mxu0 0
    %1702 = vmatpush1.bf16.msra.mxu0 0
    %1703 = vmatprep.subr.bf16.mxu0 0
    %1704 = vmatpush1.bf16.msra.mxu0 0
    %1705 = vmatprep.subr.bf16.mxu0 0
    %1706 = vmatpush1.bf16.msra.mxu0 0
    %1707 = vmatprep.subr.bf16.mxu0 0
    %1708 = vmatpush1.bf16.msra.mxu0 0
    %1709 = vmatprep.subr.bf16.mxu0 0
    %1710 = vmatpush1.bf16.msra.mxu0 0
    %1711 = vmatprep.subr.bf16.mxu0 0
    %1712 = vmatpush1.bf16.msra.mxu0 0
    %1713 = vmatprep.subr.bf16.mxu0 0
    %1714 = vmatpush1.bf16.msra.mxu0 0
    %1715 = vmatprep.subr.bf16.mxu0 0
    %1716 = vmatpush1.bf16.msra.mxu0 0
    %1717 = vmatprep.subr.bf16.mxu0 0
    %1718 = vmatpush1.bf16.msra.mxu0 0
    %1719 = vmatprep.subr.bf16.mxu0 0
    %1720 = vmatpush1.bf16.msra.mxu0 0
    %1721 = vmatprep.subr.bf16.mxu0 0
    %1722 = vmatpush1.bf16.msra.mxu0 0
    %1723 = vmatprep.subr.bf16.mxu0 0
    %1724 = vmatpush1.bf16.msra.mxu0 0
    %1725 = vmatprep.subr.bf16.mxu0 0
    %1726 = vmatpush1.bf16.msra.mxu0 0
    %1727 = vmatprep.subr.bf16.mxu0 0
    %1728 = vmatpush1.bf16.msra.mxu0 0
    %1729 = vmatprep.mubr.bf16.mxu0 0
    %1730 = vmatmul.mubr.bf16.gmra.mrb[0].mxu0 %v1692
    %v1731 = vpop.f32.mrb[0].mxu0
    %v1732 = vadd.f32 0.0, %v1731
    %v1733 = vpop.f32.mrb[0].mxu0
    %v1734 = vpop.f32.mrb[0].mxu0
    %v1735 = vpop.f32.mrb[0].mxu0
    %1736 = vdwg.mxu0
    %v1737 = vpack.c.bf16 %v1732, %v1684
    %s1738 = scalar_lea.vmem [#allocation7], 10
    %v1739 = vld [vmem:[%s1738] sm:$0x3]
    %v1741 = vsel %vm160, %v1737, 0
    %v1744 = vsel %vm382, %v1739, 0
    %1746 = vmatprep.subr.bf16.mxu0 0
    %1747 = vmatpush1.bf16.msra.mxu0 %v1744
    %1748 = vmatprep.subr.bf16.mxu0 0
    %1749 = vmatpush1.bf16.msra.mxu0 0
    %1750 = vmatprep.subr.bf16.mxu0 0
    %1751 = vmatpush1.bf16.msra.mxu0 0
    %1752 = vmatprep.subr.bf16.mxu0 0
    %1753 = vmatpush1.bf16.msra.mxu0 0
    %1754 = vmatprep.subr.bf16.mxu0 0
    %1755 = vmatpush1.bf16.msra.mxu0 0
    %1756 = vmatprep.subr.bf16.mxu0 0
    %1757 = vmatpush1.bf16.msra.mxu0 0
    %1758 = vmatprep.subr.bf16.mxu0 0
    %1759 = vmatpush1.bf16.msra.mxu0 0
    %1760 = vmatprep.subr.bf16.mxu0 0
    %1761 = vmatpush1.bf16.msra.mxu0 0
    %1762 = vmatprep.subr.bf16.mxu0 0
    %1763 = vmatpush1.bf16.msra.mxu0 0
    %1764 = vmatprep.subr.bf16.mxu0 0
    %1765 = vmatpush1.bf16.msra.mxu0 0
    %1766 = vmatprep.subr.bf16.mxu0 0
    %1767 = vmatpush1.bf16.msra.mxu0 0
    %1768 = vmatprep.subr.bf16.mxu0 0
    %1769 = vmatpush1.bf16.msra.mxu0 0
    %1770 = vmatprep.subr.bf16.mxu0 0
    %1771 = vmatpush1.bf16.msra.mxu0 0
    %1772 = vmatprep.subr.bf16.mxu0 0
    %1773 = vmatpush1.bf16.msra.mxu0 0
    %1774 = vmatprep.subr.bf16.mxu0 0
    %1775 = vmatpush1.bf16.msra.mxu0 0
    %1776 = vmatprep.subr.bf16.mxu0 0
    %1777 = vmatpush1.bf16.msra.mxu0 0
    %1778 = vmatprep.mubr.bf16.mxu0 0
    %1779 = vmatmul.mubr.bf16.gmra.mrb[0].mxu0 %v1741
    %v1780 = vpop.f32.mrb[0].mxu0
    %v1781 = vadd.f32 0.0, %v1780
    %v1782 = vpop.f32.mrb[0].mxu0
    %v1783 = vpop.f32.mrb[0].mxu0
    %v1784 = vadd.f32 0.0, %v1783
    %v1785 = vpop.f32.mrb[0].mxu0
    %1786 = vdwg.mxu0
    %v1787 = vadd.f32 %v1515, %v1781
    %v1788 = vadd.f32 %v1516, %v1784
    %1789 = vrot.lane.b32.xlu0 %v135, 104
    %v1790 = vpop.permute.xlu0 %1789
    %1791 = vrot.lane.b32.xlu0 %v135, 72
    %v1792 = vpop.permute.xlu0 %1791
    %v1794 = vsel %vm160, %v1790, 0
    %v1797 = vsel %vm160, %v1792, 0
    %1799 = vmatprep.subr.bf16.mxu0 0
    %1800 = vmatpush1.bf16.xpose.msra.mxu0 %v1797
    %1801 = vmatprep.subr.bf16.mxu0 0
    %1802 = vmatpush1.bf16.xpose.msra.mxu0 0
    %1803 = vmatprep.subr.bf16.mxu0 0
    %1804 = vmatpush1.bf16.xpose.msra.mxu0 0
    %1805 = vmatprep.subr.bf16.mxu0 0
    %1806 = vmatpush1.bf16.xpose.msra.mxu0 0
    %1807 = vmatprep.subr.bf16.mxu0 0
    %1808 = vmatpush1.bf16.xpose.msra.mxu0 0
    %1809 = vmatprep.subr.bf16.mxu0 0
    %1810 = vmatpush1.bf16.xpose.msra.mxu0 0
    %1811 = vmatprep.subr.bf16.mxu0 0
    %1812 = vmatpush1.bf16.xpose.msra.mxu0 0
    %1813 = vmatprep.subr.bf16.mxu0 0
    %1814 = vmatpush1.bf16.xpose.msra.mxu0 0
    %1815 = vmatprep.subr.bf16.mxu0 0
    %1816 = vmatpush1.bf16.xpose.msra.mxu0 0
    %1817 = vmatprep.subr.bf16.mxu0 0
    %1818 = vmatpush1.bf16.xpose.msra.mxu0 0
    %1819 = vmatprep.subr.bf16.mxu0 0
    %1820 = vmatpush1.bf16.xpose.msra.mxu0 0
    %1821 = vmatprep.subr.bf16.mxu0 0
    %1822 = vmatpush1.bf16.xpose.msra.mxu0 0
    %1823 = vmatprep.subr.bf16.mxu0 0
    %1824 = vmatpush1.bf16.xpose.msra.mxu0 0
    %1825 = vmatprep.subr.bf16.mxu0 0
    %1826 = vmatpush1.bf16.xpose.msra.mxu0 0
    %1827 = vmatprep.subr.bf16.mxu0 0
    %1828 = vmatpush1.bf16.xpose.msra.mxu0 0
    %1829 = vmatprep.subr.bf16.mxu0 0
    %1830 = vmatpush1.bf16.xpose.msra.mxu0 0
    %1831 = vmatprep.mubr.bf16.mxu0 0
    %1832 = vmatmul.mubr.bf16.gmra.mrb[0].mxu0 %v1794
    %v1833 = vpop.f32.mrb[0].mxu0
    %v1834 = vadd.f32 %v144, %v1833
    %v1835 = vpop.f32.mrb[0].mxu0
    %v1836 = vpop.f32.mrb[0].mxu0
    %v1837 = vpop.f32.mrb[0].mxu0
    %1838 = vdwg.mxu0
    %1839 = vrot.lane.b32.xlu0 %v136, 104
    %v1840 = vpop.permute.xlu0 %1839
    %1841 = vrot.lane.b32.xlu0 %v136, 72
    %v1842 = vpop.permute.xlu0 %1841
    %v1844 = vsel %vm160, %v1840, 0
    %v1847 = vsel %vm160, %v1842, 0
    %1849 = vmatprep.subr.bf16.mxu0 0
    %1850 = vmatpush1.bf16.xpose.msra.mxu0 %v1847
    %1851 = vmatprep.subr.bf16.mxu0 0
    %1852 = vmatpush1.bf16.xpose.msra.mxu0 0
    %1853 = vmatprep.subr.bf16.mxu0 0
    %1854 = vmatpush1.bf16.xpose.msra.mxu0 0
    %1855 = vmatprep.subr.bf16.mxu0 0
    %1856 = vmatpush1.bf16.xpose.msra.mxu0 0
    %1857 = vmatprep.subr.bf16.mxu0 0
    %1858 = vmatpush1.bf16.xpose.msra.mxu0 0
    %1859 = vmatprep.subr.bf16.mxu0 0
    %1860 = vmatpush1.bf16.xpose.msra.mxu0 0
    %1861 = vmatprep.subr.bf16.mxu0 0
    %1862 = vmatpush1.bf16.xpose.msra.mxu0 0
    %1863 = vmatprep.subr.bf16.mxu0 0
    %1864 = vmatpush1.bf16.xpose.msra.mxu0 0
    %1865 = vmatprep.subr.bf16.mxu0 0
    %1866 = vmatpush1.bf16.xpose.msra.mxu0 0
    %1867 = vmatprep.subr.bf16.mxu0 0
    %1868 = vmatpush1.bf16.xpose.msra.mxu0 0
    %1869 = vmatprep.subr.bf16.mxu0 0
    %1870 = vmatpush1.bf16.xpose.msra.mxu0 0
    %1871 = vmatprep.subr.bf16.mxu0 0
    %1872 = vmatpush1.bf16.xpose.msra.mxu0 0
    %1873 = vmatprep.subr.bf16.mxu0 0
    %1874 = vmatpush1.bf16.xpose.msra.mxu0 0
    %1875 = vmatprep.subr.bf16.mxu0 0
    %1876 = vmatpush1.bf16.xpose.msra.mxu0 0
    %1877 = vmatprep.subr.bf16.mxu0 0
    %1878 = vmatpush1.bf16.xpose.msra.mxu0 0
    %1879 = vmatprep.subr.bf16.mxu0 0
    %1880 = vmatpush1.bf16.xpose.msra.mxu0 0
    %1881 = vmatprep.mubr.bf16.mxu0 0
    %1882 = vmatmul.mubr.bf16.gmra.mrb[0].mxu0 %v1844
    %v1883 = vpop.f32.mrb[0].mxu0
    %v1884 = vadd.f32 %v148, %v1883
    %v1885 = vpop.f32.mrb[0].mxu0
    %v1886 = vpop.f32.mrb[0].mxu0
    %v1887 = vpop.f32.mrb[0].mxu0
    %1888 = vdwg.mxu0
    %v1889 = vsel %vm255, %v1834, -inf
    %1890 = vmax.xlane.f32.xlu0 %v1889
    %v1891 = vpop.xlane.xlu0 %1890
    %v1892 = vsel %vm255, %v1884, -inf
    %1893 = vmax.xlane.f32.xlu0 %v1892
    %v1894 = vpop.xlane.xlu0 %1893
    %v1895 = vsub.f32 %v1834, %v1891
    %v1896 = vsub.f32 %v1884, %v1894
    %v1897 = vmul.f32 %v1895, 1.442695
    %v1898 = vpow.pop %v1897
    %v1899 = vmul.f32 %v1896, 1.442695
    %v1900 = vpow.pop %v1899
    %v1901 = vsel %vm255, %v1898, 0.0
    %1902 = vadd.xlane.f32.xlu0 %v1901
    %v1903 = vpop.xlane.xlu0 %1902
    %v1904 = vsel %vm255, %v1900, 0.0
    %1905 = vadd.xlane.f32.xlu0 %v1904
    %v1906 = vpop.xlane.xlu0 %1905
    %v1907 = vrcp.pop %v1903
    %v1908 = vrcp.pop %v1906
    %v1909 = vmul.f32 %v1898, %v1907
    %v1910 = vmul.f32 %v1900, %v1908
    %v1911 = vpack.c.bf16 %v1909, %v1909
    %v1912 = vpack.c.bf16 %v1910, %v1910
    %1913 = vrot.lane.b32.xlu0 %v135, 40
    %v1914 = vpop.permute.xlu0 %1913
    %v1916 = vsel %vm255, %v1911, 0
    %v1919 = vsel %vm285, %v1914, 0
    %1921 = vmatprep.subr.bf16.mxu0 0
    %1922 = vmatpush1.bf16.msra.mxu0 %v1919
    %1923 = vmatprep.subr.bf16.mxu0 0
    %1924 = vmatpush1.bf16.msra.mxu0 0
    %1925 = vmatprep.subr.bf16.mxu0 0
    %1926 = vmatpush1.bf16.msra.mxu0 0
    %1927 = vmatprep.subr.bf16.mxu0 0
    %1928 = vmatpush1.bf16.msra.mxu0 0
    %1929 = vmatprep.subr.bf16.mxu0 0
    %1930 = vmatpush1.bf16.msra.mxu0 0
    %1931 = vmatprep.subr.bf16.mxu0 0
    %1932 = vmatpush1.bf16.msra.mxu0 0
    %1933 = vmatprep.subr.bf16.mxu0 0
    %1934 = vmatpush1.bf16.msra.mxu0 0
    %1935 = vmatprep.subr.bf16.mxu0 0
    %1936 = vmatpush1.bf16.msra.mxu0 0
    %1937 = vmatprep.subr.bf16.mxu0 0
    %1938 = vmatpush1.bf16.msra.mxu0 0
    %1939 = vmatprep.subr.bf16.mxu0 0
    %1940 = vmatpush1.bf16.msra.mxu0 0
    %1941 = vmatprep.subr.bf16.mxu0 0
    %1942 = vmatpush1.bf16.msra.mxu0 0
    %1943 = vmatprep.subr.bf16.mxu0 0
    %1944 = vmatpush1.bf16.msra.mxu0 0
    %1945 = vmatprep.subr.bf16.mxu0 0
    %1946 = vmatpush1.bf16.msra.mxu0 0
    %1947 = vmatprep.subr.bf16.mxu0 0
    %1948 = vmatpush1.bf16.msra.mxu0 0
    %1949 = vmatprep.subr.bf16.mxu0 0
    %1950 = vmatpush1.bf16.msra.mxu0 0
    %1951 = vmatprep.subr.bf16.mxu0 0
    %1952 = vmatpush1.bf16.msra.mxu0 0
    %1953 = vmatprep.mubr.bf16.mxu0 0
    %1954 = vmatmul.mubr.bf16.gmra.mrb[0].mxu0 %v1916
    %v1955 = vpop.f32.mrb[0].mxu0
    %v1956 = vadd.f32 0.0, %v1955
    %v1957 = vpop.f32.mrb[0].mxu0
    %v1958 = vpop.f32.mrb[0].mxu0
    %v1959 = vpop.f32.mrb[0].mxu0
    %1960 = vdwg.mxu0
    %1961 = vrot.lane.b32.xlu0 %v136, 40
    %v1962 = vpop.permute.xlu0 %1961
    %v1964 = vsel %vm255, %v1912, 0
    %v1967 = vsel %vm285, %v1962, 0
    %1969 = vmatprep.subr.bf16.mxu0 0
    %1970 = vmatpush1.bf16.msra.mxu0 %v1967
    %1971 = vmatprep.subr.bf16.mxu0 0
    %1972 = vmatpush1.bf16.msra.mxu0 0
    %1973 = vmatprep.subr.bf16.mxu0 0
    %1974 = vmatpush1.bf16.msra.mxu0 0
    %1975 = vmatprep.subr.bf16.mxu0 0
    %1976 = vmatpush1.bf16.msra.mxu0 0
    %1977 = vmatprep.subr.bf16.mxu0 0
    %1978 = vmatpush1.bf16.msra.mxu0 0
    %1979 = vmatprep.subr.bf16.mxu0 0
    %1980 = vmatpush1.bf16.msra.mxu0 0
    %1981 = vmatprep.subr.bf16.mxu0 0
    %1982 = vmatpush1.bf16.msra.mxu0 0
    %1983 = vmatprep.subr.bf16.mxu0 0
    %1984 = vmatpush1.bf16.msra.mxu0 0
    %1985 = vmatprep.subr.bf16.mxu0 0
    %1986 = vmatpush1.bf16.msra.mxu0 0
    %1987 = vmatprep.subr.bf16.mxu0 0
    %1988 = vmatpush1.bf16.msra.mxu0 0
    %1989 = vmatprep.subr.bf16.mxu0 0
    %1990 = vmatpush1.bf16.msra.mxu0 0
    %1991 = vmatprep.subr.bf16.mxu0 0
    %1992 = vmatpush1.bf16.msra.mxu0 0
    %1993 = vmatprep.subr.bf16.mxu0 0
    %1994 = vmatpush1.bf16.msra.mxu0 0
    %1995 = vmatprep.subr.bf16.mxu0 0
    %1996 = vmatpush1.bf16.msra.mxu0 0
    %1997 = vmatprep.subr.bf16.mxu0 0
    %1998 = vmatpush1.bf16.msra.mxu0 0
    %1999 = vmatprep.subr.bf16.mxu0 0
    %2000 = vmatpush1.bf16.msra.mxu0 0
    %2001 = vmatprep.mubr.bf16.mxu0 0
    %2002 = vmatmul.mubr.bf16.gmra.mrb[0].mxu0 %v1964
    %v2003 = vpop.f32.mrb[0].mxu0
    %v2004 = vadd.f32 0.0, %v2003
    %v2005 = vpop.f32.mrb[0].mxu0
    %v2006 = vpop.f32.mrb[0].mxu0
    %v2007 = vpop.f32.mrb[0].mxu0
    %2008 = vdwg.mxu0
    %v2009 = vpack.c.bf16 %v2004, %v1956
    %s2010 = scalar_lea.vmem [#allocation7], 12
    %v2011 = vld [vmem:[%s2010] sm:$0x3]
    %v2013 = vsel %vm160, %v2009, 0
    %v2016 = vsel %vm382, %v2011, 0
    %2018 = vmatprep.subr.bf16.mxu0 0
    %2019 = vmatpush1.bf16.msra.mxu0 %v2016
    %2020 = vmatprep.subr.bf16.mxu0 0
    %2021 = vmatpush1.bf16.msra.mxu0 0
    %2022 = vmatprep.subr.bf16.mxu0 0
    %2023 = vmatpush1.bf16.msra.mxu0 0
    %2024 = vmatprep.subr.bf16.mxu0 0
    %2025 = vmatpush1.bf16.msra.mxu0 0
    %2026 = vmatprep.subr.bf16.mxu0 0
    %2027 = vmatpush1.bf16.msra.mxu0 0
    %2028 = vmatprep.subr.bf16.mxu0 0
    %2029 = vmatpush1.bf16.msra.mxu0 0
    %2030 = vmatprep.subr.bf16.mxu0 0
    %2031 = vmatpush1.bf16.msra.mxu0 0
    %2032 = vmatprep.subr.bf16.mxu0 0
    %2033 = vmatpush1.bf16.msra.mxu0 0
    %2034 = vmatprep.subr.bf16.mxu0 0
    %2035 = vmatpush1.bf16.msra.mxu0 0
    %2036 = vmatprep.subr.bf16.mxu0 0
    %2037 = vmatpush1.bf16.msra.mxu0 0
    %2038 = vmatprep.subr.bf16.mxu0 0
    %2039 = vmatpush1.bf16.msra.mxu0 0
    %2040 = vmatprep.subr.bf16.mxu0 0
    %2041 = vmatpush1.bf16.msra.mxu0 0
    %2042 = vmatprep.subr.bf16.mxu0 0
    %2043 = vmatpush1.bf16.msra.mxu0 0
    %2044 = vmatprep.subr.bf16.mxu0 0
    %2045 = vmatpush1.bf16.msra.mxu0 0
    %2046 = vmatprep.subr.bf16.mxu0 0
    %2047 = vmatpush1.bf16.msra.mxu0 0
    %2048 = vmatprep.subr.bf16.mxu0 0
    %2049 = vmatpush1.bf16.msra.mxu0 0
    %2050 = vmatprep.mubr.bf16.mxu0 0
    %2051 = vmatmul.mubr.bf16.gmra.mrb[0].mxu0 %v2013
    %v2052 = vpop.f32.mrb[0].mxu0
    %v2053 = vadd.f32 0.0, %v2052
    %v2054 = vpop.f32.mrb[0].mxu0
    %v2055 = vpop.f32.mrb[0].mxu0
    %v2056 = vadd.f32 0.0, %v2055
    %v2057 = vpop.f32.mrb[0].mxu0
    %2058 = vdwg.mxu0
    %v2059 = vadd.f32 %v1787, %v2053
    %v2060 = vadd.f32 %v1788, %v2056
    %2061 = vrot.lane.b32.xlu0 %v135, 100
    %v2062 = vpop.permute.xlu0 %2061
    %2063 = vrot.lane.b32.xlu0 %v135, 68
    %v2064 = vpop.permute.xlu0 %2063
    %v2066 = vsel %vm160, %v2062, 0
    %v2069 = vsel %vm160, %v2064, 0
    %2071 = vmatprep.subr.bf16.mxu0 0
    %2072 = vmatpush1.bf16.xpose.msra.mxu0 %v2069
    %2073 = vmatprep.subr.bf16.mxu0 0
    %2074 = vmatpush1.bf16.xpose.msra.mxu0 0
    %2075 = vmatprep.subr.bf16.mxu0 0
    %2076 = vmatpush1.bf16.xpose.msra.mxu0 0
    %2077 = vmatprep.subr.bf16.mxu0 0
    %2078 = vmatpush1.bf16.xpose.msra.mxu0 0
    %2079 = vmatprep.subr.bf16.mxu0 0
    %2080 = vmatpush1.bf16.xpose.msra.mxu0 0
    %2081 = vmatprep.subr.bf16.mxu0 0
    %2082 = vmatpush1.bf16.xpose.msra.mxu0 0
    %2083 = vmatprep.subr.bf16.mxu0 0
    %2084 = vmatpush1.bf16.xpose.msra.mxu0 0
    %2085 = vmatprep.subr.bf16.mxu0 0
    %2086 = vmatpush1.bf16.xpose.msra.mxu0 0
    %2087 = vmatprep.subr.bf16.mxu0 0
    %2088 = vmatpush1.bf16.xpose.msra.mxu0 0
    %2089 = vmatprep.subr.bf16.mxu0 0
    %2090 = vmatpush1.bf16.xpose.msra.mxu0 0
    %2091 = vmatprep.subr.bf16.mxu0 0
    %2092 = vmatpush1.bf16.xpose.msra.mxu0 0
    %2093 = vmatprep.subr.bf16.mxu0 0
    %2094 = vmatpush1.bf16.xpose.msra.mxu0 0
    %2095 = vmatprep.subr.bf16.mxu0 0
    %2096 = vmatpush1.bf16.xpose.msra.mxu0 0
    %2097 = vmatprep.subr.bf16.mxu0 0
    %2098 = vmatpush1.bf16.xpose.msra.mxu0 0
    %2099 = vmatprep.subr.bf16.mxu0 0
    %2100 = vmatpush1.bf16.xpose.msra.mxu0 0
    %2101 = vmatprep.subr.bf16.mxu0 0
    %2102 = vmatpush1.bf16.xpose.msra.mxu0 0
    %2103 = vmatprep.mubr.bf16.mxu0 0
    %2104 = vmatmul.mubr.bf16.gmra.mrb[0].mxu0 %v2066
    %v2105 = vpop.f32.mrb[0].mxu0
    %v2106 = vadd.f32 %v144, %v2105
    %v2107 = vpop.f32.mrb[0].mxu0
    %v2108 = vpop.f32.mrb[0].mxu0
    %v2109 = vpop.f32.mrb[0].mxu0
    %2110 = vdwg.mxu0
    %2111 = vrot.lane.b32.xlu0 %v136, 100
    %v2112 = vpop.permute.xlu0 %2111
    %2113 = vrot.lane.b32.xlu0 %v136, 68
    %v2114 = vpop.permute.xlu0 %2113
    %v2116 = vsel %vm160, %v2112, 0
    %v2119 = vsel %vm160, %v2114, 0
    %2121 = vmatprep.subr.bf16.mxu0 0
    %2122 = vmatpush1.bf16.xpose.msra.mxu0 %v2119
    %2123 = vmatprep.subr.bf16.mxu0 0
    %2124 = vmatpush1.bf16.xpose.msra.mxu0 0
    %2125 = vmatprep.subr.bf16.mxu0 0
    %2126 = vmatpush1.bf16.xpose.msra.mxu0 0
    %2127 = vmatprep.subr.bf16.mxu0 0
    %2128 = vmatpush1.bf16.xpose.msra.mxu0 0
    %2129 = vmatprep.subr.bf16.mxu0 0
    %2130 = vmatpush1.bf16.xpose.msra.mxu0 0
    %2131 = vmatprep.subr.bf16.mxu0 0
    %2132 = vmatpush1.bf16.xpose.msra.mxu0 0
    %2133 = vmatprep.subr.bf16.mxu0 0
    %2134 = vmatpush1.bf16.xpose.msra.mxu0 0
    %2135 = vmatprep.subr.bf16.mxu0 0
    %2136 = vmatpush1.bf16.xpose.msra.mxu0 0
    %2137 = vmatprep.subr.bf16.mxu0 0
    %2138 = vmatpush1.bf16.xpose.msra.mxu0 0
    %2139 = vmatprep.subr.bf16.mxu0 0
    %2140 = vmatpush1.bf16.xpose.msra.mxu0 0
    %2141 = vmatprep.subr.bf16.mxu0 0
    %2142 = vmatpush1.bf16.xpose.msra.mxu0 0
    %2143 = vmatprep.subr.bf16.mxu0 0
    %2144 = vmatpush1.bf16.xpose.msra.mxu0 0
    %2145 = vmatprep.subr.bf16.mxu0 0
    %2146 = vmatpush1.bf16.xpose.msra.mxu0 0
    %2147 = vmatprep.subr.bf16.mxu0 0
    %2148 = vmatpush1.bf16.xpose.msra.mxu0 0
    %2149 = vmatprep.subr.bf16.mxu0 0
    %2150 = vmatpush1.bf16.xpose.msra.mxu0 0
    %2151 = vmatprep.subr.bf16.mxu0 0
    %2152 = vmatpush1.bf16.xpose.msra.mxu0 0
    %2153 = vmatprep.mubr.bf16.mxu0 0
    %2154 = vmatmul.mubr.bf16.gmra.mrb[0].mxu0 %v2116
    %v2155 = vpop.f32.mrb[0].mxu0
    %v2156 = vadd.f32 %v148, %v2155
    %v2157 = vpop.f32.mrb[0].mxu0
    %v2158 = vpop.f32.mrb[0].mxu0
    %v2159 = vpop.f32.mrb[0].mxu0
    %2160 = vdwg.mxu0
    %v2161 = vsel %vm255, %v2106, -inf
    %2162 = vmax.xlane.f32.xlu0 %v2161
    %v2163 = vpop.xlane.xlu0 %2162
    %v2164 = vsel %vm255, %v2156, -inf
    %2165 = vmax.xlane.f32.xlu0 %v2164
    %v2166 = vpop.xlane.xlu0 %2165
    %v2167 = vsub.f32 %v2106, %v2163
    %v2168 = vsub.f32 %v2156, %v2166
    %v2169 = vmul.f32 %v2167, 1.442695
    %v2170 = vpow.pop %v2169
    %v2171 = vmul.f32 %v2168, 1.442695
    %v2172 = vpow.pop %v2171
    %v2173 = vsel %vm255, %v2170, 0.0
    %2174 = vadd.xlane.f32.xlu0 %v2173
    %v2175 = vpop.xlane.xlu0 %2174
    %v2176 = vsel %vm255, %v2172, 0.0
    %2177 = vadd.xlane.f32.xlu0 %v2176
    %v2178 = vpop.xlane.xlu0 %2177
    %v2179 = vrcp.pop %v2175
    %v2180 = vrcp.pop %v2178
    %v2181 = vmul.f32 %v2170, %v2179
    %v2182 = vmul.f32 %v2172, %v2180
    %v2183 = vpack.c.bf16 %v2181, %v2181
    %v2184 = vpack.c.bf16 %v2182, %v2182
    %2185 = vrot.lane.b32.xlu0 %v135, 36
    %v2186 = vpop.permute.xlu0 %2185
    %v2188 = vsel %vm255, %v2183, 0
    %v2191 = vsel %vm285, %v2186, 0
    %2193 = vmatprep.subr.bf16.mxu0 0
    %2194 = vmatpush1.bf16.msra.mxu0 %v2191
    %2195 = vmatprep.subr.bf16.mxu0 0
    %2196 = vmatpush1.bf16.msra.mxu0 0
    %2197 = vmatprep.subr.bf16.mxu0 0
    %2198 = vmatpush1.bf16.msra.mxu0 0
    %2199 = vmatprep.subr.bf16.mxu0 0
    %2200 = vmatpush1.bf16.msra.mxu0 0
    %2201 = vmatprep.subr.bf16.mxu0 0
    %2202 = vmatpush1.bf16.msra.mxu0 0
    %2203 = vmatprep.subr.bf16.mxu0 0
    %2204 = vmatpush1.bf16.msra.mxu0 0
    %2205 = vmatprep.subr.bf16.mxu0 0
    %2206 = vmatpush1.bf16.msra.mxu0 0
    %2207 = vmatprep.subr.bf16.mxu0 0
    %2208 = vmatpush1.bf16.msra.mxu0 0
    %2209 = vmatprep.subr.bf16.mxu0 0
    %2210 = vmatpush1.bf16.msra.mxu0 0
    %2211 = vmatprep.subr.bf16.mxu0 0
    %2212 = vmatpush1.bf16.msra.mxu0 0
    %2213 = vmatprep.subr.bf16.mxu0 0
    %2214 = vmatpush1.bf16.msra.mxu0 0
    %2215 = vmatprep.subr.bf16.mxu0 0
    %2216 = vmatpush1.bf16.msra.mxu0 0
    %2217 = vmatprep.subr.bf16.mxu0 0
    %2218 = vmatpush1.bf16.msra.mxu0 0
    %2219 = vmatprep.subr.bf16.mxu0 0
    %2220 = vmatpush1.bf16.msra.mxu0 0
    %2221 = vmatprep.subr.bf16.mxu0 0
    %2222 = vmatpush1.bf16.msra.mxu0 0
    %2223 = vmatprep.subr.bf16.mxu0 0
    %2224 = vmatpush1.bf16.msra.mxu0 0
    %2225 = vmatprep.mubr.bf16.mxu0 0
    %2226 = vmatmul.mubr.bf16.gmra.mrb[0].mxu0 %v2188
    %v2227 = vpop.f32.mrb[0].mxu0
    %v2228 = vadd.f32 0.0, %v2227
    %v2229 = vpop.f32.mrb[0].mxu0
    %v2230 = vpop.f32.mrb[0].mxu0
    %v2231 = vpop.f32.mrb[0].mxu0
    %2232 = vdwg.mxu0
    %2233 = vrot.lane.b32.xlu0 %v136, 36
    %v2234 = vpop.permute.xlu0 %2233
    %v2236 = vsel %vm255, %v2184, 0
    %v2239 = vsel %vm285, %v2234, 0
    %2241 = vmatprep.subr.bf16.mxu0 0
    %2242 = vmatpush1.bf16.msra.mxu0 %v2239
    %2243 = vmatprep.subr.bf16.mxu0 0
    %2244 = vmatpush1.bf16.msra.mxu0 0
    %2245 = vmatprep.subr.bf16.mxu0 0
    %2246 = vmatpush1.bf16.msra.mxu0 0
    %2247 = vmatprep.subr.bf16.mxu0 0
    %2248 = vmatpush1.bf16.msra.mxu0 0
    %2249 = vmatprep.subr.bf16.mxu0 0
    %2250 = vmatpush1.bf16.msra.mxu0 0
    %2251 = vmatprep.subr.bf16.mxu0 0
    %2252 = vmatpush1.bf16.msra.mxu0 0
    %2253 = vmatprep.subr.bf16.mxu0 0
    %2254 = vmatpush1.bf16.msra.mxu0 0
    %2255 = vmatprep.subr.bf16.mxu0 0
    %2256 = vmatpush1.bf16.msra.mxu0 0
    %2257 = vmatprep.subr.bf16.mxu0 0
    %2258 = vmatpush1.bf16.msra.mxu0 0
    %2259 = vmatprep.subr.bf16.mxu0 0
    %2260 = vmatpush1.bf16.msra.mxu0 0
    %2261 = vmatprep.subr.bf16.mxu0 0
    %2262 = vmatpush1.bf16.msra.mxu0 0
    %2263 = vmatprep.subr.bf16.mxu0 0
    %2264 = vmatpush1.bf16.msra.mxu0 0
    %2265 = vmatprep.subr.bf16.mxu0 0
    %2266 = vmatpush1.bf16.msra.mxu0 0
    %2267 = vmatprep.subr.bf16.mxu0 0
    %2268 = vmatpush1.bf16.msra.mxu0 0
    %2269 = vmatprep.subr.bf16.mxu0 0
    %2270 = vmatpush1.bf16.msra.mxu0 0
    %2271 = vmatprep.subr.bf16.mxu0 0
    %2272 = vmatpush1.bf16.msra.mxu0 0
    %2273 = vmatprep.mubr.bf16.mxu0 0
    %2274 = vmatmul.mubr.bf16.gmra.mrb[0].mxu0 %v2236
    %v2275 = vpop.f32.mrb[0].mxu0
    %v2276 = vadd.f32 0.0, %v2275
    %v2277 = vpop.f32.mrb[0].mxu0
    %v2278 = vpop.f32.mrb[0].mxu0
    %v2279 = vpop.f32.mrb[0].mxu0
    %2280 = vdwg.mxu0
    %v2281 = vpack.c.bf16 %v2276, %v2228
    %s2282 = scalar_lea.vmem [#allocation7], 14
    %v2283 = vld [vmem:[%s2282] sm:$0x3]
    %v2285 = vsel %vm160, %v2281, 0
    %v2288 = vsel %vm382, %v2283, 0
    %2290 = vmatprep.subr.bf16.mxu0 0
    %2291 = vmatpush1.bf16.msra.mxu0 %v2288
    %2292 = vmatprep.subr.bf16.mxu0 0
    %2293 = vmatpush1.bf16.msra.mxu0 0
    %2294 = vmatprep.subr.bf16.mxu0 0
    %2295 = vmatpush1.bf16.msra.mxu0 0
    %2296 = vmatprep.subr.bf16.mxu0 0
    %2297 = vmatpush1.bf16.msra.mxu0 0
    %2298 = vmatprep.subr.bf16.mxu0 0
    %2299 = vmatpush1.bf16.msra.mxu0 0
    %2300 = vmatprep.subr.bf16.mxu0 0
    %2301 = vmatpush1.bf16.msra.mxu0 0
    %2302 = vmatprep.subr.bf16.mxu0 0
    %2303 = vmatpush1.bf16.msra.mxu0 0
    %2304 = vmatprep.subr.bf16.mxu0 0
    %2305 = vmatpush1.bf16.msra.mxu0 0
    %2306 = vmatprep.subr.bf16.mxu0 0
    %2307 = vmatpush1.bf16.msra.mxu0 0
    %2308 = vmatprep.subr.bf16.mxu0 0
    %2309 = vmatpush1.bf16.msra.mxu0 0
    %2310 = vmatprep.subr.bf16.mxu0 0
    %2311 = vmatpush1.bf16.msra.mxu0 0
    %2312 = vmatprep.subr.bf16.mxu0 0
    %2313 = vmatpush1.bf16.msra.mxu0 0
    %2314 = vmatprep.subr.bf16.mxu0 0
    %2315 = vmatpush1.bf16.msra.mxu0 0
    %2316 = vmatprep.subr.bf16.mxu0 0
    %2317 = vmatpush1.bf16.msra.mxu0 0
    %2318 = vmatprep.subr.bf16.mxu0 0
    %2319 = vmatpush1.bf16.msra.mxu0 0
    %2320 = vmatprep.subr.bf16.mxu0 0
    %2321 = vmatpush1.bf16.msra.mxu0 0
    %2322 = vmatprep.mubr.bf16.mxu0 0
    %2323 = vmatmul.mubr.bf16.gmra.mrb[0].mxu0 %v2285
    %v2324 = vpop.f32.mrb[0].mxu0
    %v2325 = vadd.f32 0.0, %v2324
    %v2326 = vpop.f32.mrb[0].mxu0
    %v2327 = vpop.f32.mrb[0].mxu0
    %v2328 = vadd.f32 0.0, %v2327
    %v2329 = vpop.f32.mrb[0].mxu0
    %2330 = vdwg.mxu0
    %v2331 = vadd.f32 %v2059, %v2325
    %v2332 = vadd.f32 %v2060, %v2328
    %2333 = vst.msk [vmem:[#allocation8] sm:$0xff] %vm86, %v2331
    %2334 = vst.msk [vmem:[#allocation8 + $0x8] sm:$0xff] %vm86, %v2332
    // Predicated region
    $region34: #{tpu_custom_call.1} parent=1 // pred_check
      _
    $region35: #{tpu_custom_call.1} parent=1 // pred_check_branch
      %2336 = sbr.rel (0) target = $region37
    $region36: #{tpu_custom_call.1} parent=1 // pred_region
      %s2338 = ssub.s32 256, 256
      %2339 = vsyncadd [#allocation4], %s2338
      %s2340 = sshll.u32 [#allocation8], 4
      %s2341 = int_to_ptr.vmem [resolvable:$true] %s2340
      %2346 = dma.vmem_to_hbm [thread:$0]  %s2341, 256, %s5, [#allocation4], 128, 128, 8
    $region37: #{tpu_custom_call.1} parent=1 // pred_fallthru
      _
    // Predicated region
    $region38: #{tpu_custom_call.1} parent=1 // pred_check
      _
    $region39: #{tpu_custom_call.1} parent=1 // pred_check_branch
      %2348 = sbr.rel (0) target = $region41
    $region40: #{tpu_custom_call.1} parent=1 // pred_region
      %2349 = dma.done [#allocation4], 256
    $region41: #{tpu_custom_call.1} parent=1 // pred_fallthru
      _
    %2350 = vsyncpa [#allocation3], 1
    %2351 = vsyncpa [#allocation6], 1
    %2352 = vsyncpa [#allocation4], 1

</llo_original>
